<compile_context>
chip_gen: v7x
topology: tpu7x:2x2x1
jax: 0.10.0
libtpu: 0.0.40
codegen_flags: <defaults>
</compile_context>

<pallas_src>
import functools

import jax
import jax.numpy as jnp
from jax import lax
from jax.experimental import pallas as pl
from jax.experimental.pallas import tpu as pltpu

EPS = 1e-5
_VMEM_LIMIT = 32 * 1024 * 1024


def _round_up(x, m):
    return (x + m - 1) // m * m


def _fold_bn(bn):
    """(gamma, beta, running_mean, running_var) -> per-channel (scale, shift)."""
    gamma, beta, mean, var = bn
    scale = gamma * lax.rsqrt(var + EPS)
    shift = beta - mean * scale
    c = scale.shape[0]
    return scale.reshape(1, c), shift.reshape(1, c)


# ---------------------------------------------------------------------------
# Kernel A: fused 1x1 conv (MXU matmul) + BN affine (+ residual) (+ ReLU).
# Row-tiled over M = N*H*W with BlockSpec pipelining.
# ---------------------------------------------------------------------------
def _matmul_bn_kernel(x_ref, w_ref, scale_ref, shift_ref, o_ref, *, relu):
    y = jnp.dot(x_ref[...], w_ref[...], preferred_element_type=jnp.float32)
    y = y * scale_ref[...] + shift_ref[...]
    if relu:
        y = jnp.maximum(y, 0.0)
    o_ref[...] = y.astype(o_ref.dtype)


def _matmul_bn_add_relu_kernel(x_ref, w_ref, scale_ref, shift_ref, res_ref, o_ref):
    y = jnp.dot(x_ref[...], w_ref[...], preferred_element_type=jnp.float32)
    y = y * scale_ref[...] + shift_ref[...] + res_ref[...].astype(jnp.float32)
    o_ref[...] = jnp.maximum(y, 0.0).astype(o_ref.dtype)


def _conv1x1_bn(x_flat, w, scale, shift, *, relu=True, residual=None, tm=256):
    """x_flat: (M, Cin), w: (Cin, Cout), scale/shift: (1, Cout),
    residual: optional (M, Cout).  Returns (M, Cout) f32."""
    M, Cin = x_flat.shape
    Cout = w.shape[1]
    tm = min(tm, _round_up(M, 8))          # tile rows; multiple of 8 sublanes
    M_pad = _round_up(M, tm)
    if M_pad != M:
        x_flat = jnp.pad(x_flat, ((0, M_pad - M), (0, 0)))
        if residual is not None:
            residual = jnp.pad(residual, ((0, M_pad - M), (0, 0)))
    grid = (M_pad // tm,)

    x_spec = pl.BlockSpec((tm, Cin), lambda i: (i, 0))
    w_spec = pl.BlockSpec((Cin, Cout), lambda i: (0, 0))
    v_spec = pl.BlockSpec((1, Cout), lambda i: (0, 0))
    o_spec = pl.BlockSpec((tm, Cout), lambda i: (i, 0))
    params = pltpu.CompilerParams(dimension_semantics=("parallel",),
                                  vmem_limit_bytes=_VMEM_LIMIT)

    if residual is None:
        out = pl.pallas_call(
            functools.partial(_matmul_bn_kernel, relu=relu),
            out_shape=jax.ShapeDtypeStruct((M_pad, Cout), jnp.float32),
            grid=grid,
            in_specs=[x_spec, w_spec, v_spec, v_spec],
            out_specs=o_spec,
            compiler_params=params,
        )(x_flat, w, scale, shift)
    else:
        r_spec = pl.BlockSpec((tm, Cout), lambda i: (i, 0))
        out = pl.pallas_call(
            _matmul_bn_add_relu_kernel,
            out_shape=jax.ShapeDtypeStruct((M_pad, Cout), jnp.float32),
            grid=grid,
            in_specs=[x_spec, w_spec, v_spec, v_spec, r_spec],
            out_specs=o_spec,
            compiler_params=params,
        )(x_flat, w, scale, shift, residual)
    return out[:M] if M_pad != M else out


# ---------------------------------------------------------------------------
# Kernel B: fused 3x3 conv (pad=1, stride=1) + BN affine + ReLU.
# Grid over (sample, output row); halo rows come in via three BlockSpecs.
# ---------------------------------------------------------------------------
def _conv3x3_bn_relu_kernel(x0_ref, x1_ref, x2_ref, w_ref, scale_ref, shift_ref,
                            o_ref):
    # x*_ref: (W+2, Cin) padded input rows h, h+1, h+2
    # w_ref : (9, Cin, Cout) taps in (ky, kx) order
    # o_ref : (W, Cout)
    w_out, c_out = o_ref.shape
    rows = (x0_ref[...], x1_ref[...], x2_ref[...])
    acc = jnp.zeros((w_out, c_out), jnp.float32)
    for ky in range(3):
        xr = rows[ky]
        for kx in range(3):
            acc = acc + jnp.dot(xr[kx:kx + w_out, :], w_ref[ky * 3 + kx],
                                preferred_element_type=jnp.float32)
    y = acc * scale_ref[...] + shift_ref[...]
    o_ref[...] = jnp.maximum(y, 0.0).astype(o_ref.dtype)


def _conv3x3_bn_relu(x_nhwc, w9, scale, shift):
    """x_nhwc: (N, H, W, Cin); w9: (9, Cin, Cout).  Returns (N, H, W, Cout) f32."""
    N, H, W, Cin = x_nhwc.shape
    Cout = w9.shape[-1]
    x_pad = jnp.pad(x_nhwc, ((0, 0), (1, 1), (1, 1), (0, 0)))  # (N, H+2, W+2, Cin)

    def row_spec(dy):
        # One padded input row (h + dy) per grid step; leading dims squeezed.
        return pl.BlockSpec((None, None, W + 2, Cin),
                            lambda n, h, dy=dy: (n, h + dy, 0, 0))

    return pl.pallas_call(
        _conv3x3_bn_relu_kernel,
        out_shape=jax.ShapeDtypeStruct((N, H, W, Cout), jnp.float32),
        grid=(N, H),
        in_specs=[row_spec(0), row_spec(1), row_spec(2),
                  pl.BlockSpec((9, Cin, Cout), lambda n, h: (0, 0, 0)),
                  pl.BlockSpec((1, Cout), lambda n, h: (0, 0)),
                  pl.BlockSpec((1, Cout), lambda n, h: (0, 0))],
        out_specs=pl.BlockSpec((None, None, W, Cout), lambda n, h: (n, h, 0, 0)),
        compiler_params=pltpu.CompilerParams(
            dimension_semantics=("parallel", "parallel"),
            vmem_limit_bytes=_VMEM_LIMIT),
    )(x_pad, x_pad, x_pad, w9, scale, shift)


# ---------------------------------------------------------------------------
# Full Bottleneck forward.
# ---------------------------------------------------------------------------
@jax.jit
def bottleneck_pallas(x_nchw, conv1_w, bn1, conv2_w, bn2, conv3_w, bn3):
    """x_nchw: (N, inplanes, H, W); conv1_w: (planes, inplanes);
    conv2_w: (planes, planes, 3, 3) OIHW; conv3_w: (4*planes, planes);
    bn*: (gamma, beta, running_mean, running_var).  stride=1, identity residual."""
    N, Cin, H, W = x_nchw.shape
    planes = conv1_w.shape[0]
    Cexp = conv3_w.shape[0]
    assert Cexp == Cin, "identity residual requires inplanes == 4*planes"

    x_nhwc = jnp.transpose(x_nchw, (0, 2, 3, 1))
    M = N * H * W
    x_flat = x_nhwc.reshape(M, Cin)

    s1, b1 = _fold_bn(bn1)
    s2, b2 = _fold_bn(bn2)
    s3, b3 = _fold_bn(bn3)

    # conv1 (1x1) + bn1 + relu
    out1 = _conv1x1_bn(x_flat, conv1_w.T, s1, b1, relu=True)             # (M, planes)

    # conv2 (3x3, pad=1) + bn2 + relu
    w2 = jnp.transpose(conv2_w, (2, 3, 1, 0)).reshape(9, planes, planes)  # (ky,kx,Ci,Co)
    out2 = _conv3x3_bn_relu(out1.reshape(N, H, W, planes), w2, s2, b2)    # (N,H,W,planes)

    # conv3 (1x1) + bn3 + residual add + relu
    out3 = _conv1x1_bn(out2.reshape(M, planes), conv3_w.T, s3, b3,
                       relu=True, residual=x_flat)                        # (M, Cexp)

    return jnp.transpose(out3.reshape(N, H, W, Cexp), (0, 3, 1, 2))


def bottleneck_reference(x, conv1_w, bn1, conv2_w, bn2, conv3_w, bn3):
    """Pure-JAX reference with identical (inference-BN) semantics."""
    def bn(y, p):
        g, b, m, v = (a.reshape(1, -1, 1, 1) for a in p)
        return (y - m) * lax.rsqrt(v + EPS) * g + b

    dn = ("NCHW", "OIHW", "NCHW")
    hp = lax.Precision.HIGHEST
    out = lax.conv_general_dilated(x, conv1_w[:, :, None, None], (1, 1), "VALID",
                                   dimension_numbers=dn, precision=hp)
    out = jnp.maximum(bn(out, bn1), 0.0)
    out = lax.conv_general_dilated(out, conv2_w, (1, 1), ((1, 1), (1, 1)),
                                   dimension_numbers=dn, precision=hp)
    out = jnp.maximum(bn(out, bn2), 0.0)
    out = lax.conv_general_dilated(out, conv3_w[:, :, None, None], (1, 1), "VALID",
                                   dimension_numbers=dn, precision=hp)
    out = bn(out, bn3)
    return jnp.maximum(out + x, 0.0)


if __name__ == "__main__":
    # Small shapes consistent with the module: inplanes = 4 * planes (identity residual).
    N, inplanes, planes, H, W = 2, 64, 16, 8, 8

    key = jax.random.PRNGKey(0)
    keys = jax.random.split(key, 8)
    x = jax.random.normal(keys[0], (N, inplanes, H, W), dtype=jnp.float32)
    conv1_w = 0.1 * jax.random.normal(keys[1], (planes, inplanes), dtype=jnp.float32)
    conv2_w = 0.1 * jax.random.normal(keys[2], (planes, planes, 3, 3), dtype=jnp.float32)
    conv3_w = 0.1 * jax.random.normal(keys[3], (planes * 4, planes), dtype=jnp.float32)

    def make_bn(k, c):
        k1, k2, k3, k4 = jax.random.split(k, 4)
        gamma = 1.0 + 0.1 * jax.random.normal(k1, (c,), dtype=jnp.float32)
        beta = 0.1 * jax.random.normal(k2, (c,), dtype=jnp.float32)
        mean = 0.1 * jax.random.normal(k3, (c,), dtype=jnp.float32)
        var = jax.random.uniform(k4, (c,), jnp.float32, 0.5, 1.5)
        return gamma, beta, mean, var

    bn1 = make_bn(keys[4], planes)
    bn2 = make_bn(keys[5], planes)
    bn3 = make_bn(keys[6], planes * 4)

    out = bottleneck_pallas(x, conv1_w, bn1, conv2_w, bn2, conv3_w, bn3)
    out = jax.block_until_ready(out)
    assert out.shape == (N, planes * 4, H, W), out.shape

    ref = jax.block_until_ready(
        bottleneck_reference(x, conv1_w, bn1, conv2_w, bn2, conv3_w, bn3))
    max_err = float(jnp.max(jnp.abs(out - ref)))
    assert jnp.allclose(out, ref, rtol=2e-3, atol=2e-3), max_err

    print("KERNEL_OK")
</pallas_src>

<mosaic_0001>
module attributes {stable_mosaic.version = 11 : i64} {
  func.func @_matmul_bn_kernel(%arg0: i32, %arg1: memref<128x64xf32, #tpu.memory_space<vmem>>, %arg2: memref<64x16xf32, #tpu.memory_space<vmem>>, %arg3: memref<1x16xf32, #tpu.memory_space<vmem>>, %arg4: memref<1x16xf32, #tpu.memory_space<vmem>>, %arg5: memref<128x16xf32, #tpu.memory_space<vmem>>) attributes {dimension_semantics = [#tpu.dimension_semantics<parallel>], iteration_bounds = array<i64: 1>, scalar_prefetch = 0 : i64, scratch_operands = 0 : i64, tpu.core_type = #tpu.core_type<tc>, window_params = [{transform_indices = @transform_0, window_bounds = array<i64: 128, 64>}, {pipeline_mode = #tpu.pipeline_mode<synchronous>, transform_indices = @transform_1, window_bounds = array<i64: 64, 16>}, {pipeline_mode = #tpu.pipeline_mode<synchronous>, transform_indices = @transform_2, window_bounds = array<i64: 1, 16>}, {pipeline_mode = #tpu.pipeline_mode<synchronous>, transform_indices = @transform_3, window_bounds = array<i64: 1, 16>}, {transform_indices = @transform_4, window_bounds = array<i64: 128, 16>}]} {
    %c0 = arith.constant 0 : index
    %c0_0 = arith.constant 0 : index
    %0 = vector.load %arg1[%c0, %c0_0] : memref<128x64xf32, #tpu.memory_space<vmem>>, vector<128x64xf32>
    %c0_1 = arith.constant 0 : index
    %c0_2 = arith.constant 0 : index
    %1 = vector.load %arg2[%c0_1, %c0_2] : memref<64x16xf32, #tpu.memory_space<vmem>>, vector<64x16xf32>
    %cst = arith.constant dense<0.000000e+00> : vector<128x16xf32>
    %2 = tpu.matmul %0, %1, %cst {dimension_numbers = #tpu.dot_dimension_numbers<[1], [0], [0], [1], [0, 0, 1, 1], [], []>} : vector<128x64xf32>, vector<64x16xf32>, vector<128x16xf32> -> vector<128x16xf32>
    %c0_3 = arith.constant 0 : index
    %c0_4 = arith.constant 0 : index
    %3 = vector.load %arg3[%c0_3, %c0_4] : memref<1x16xf32, #tpu.memory_space<vmem>>, vector<1x16xf32>
    %4 = vector.broadcast %3 : vector<1x16xf32> to vector<128x16xf32>
    %5 = arith.mulf %2, %4 : vector<128x16xf32>
    %c0_5 = arith.constant 0 : index
    %c0_6 = arith.constant 0 : index
    %6 = vector.load %arg4[%c0_5, %c0_6] : memref<1x16xf32, #tpu.memory_space<vmem>>, vector<1x16xf32>
    %7 = vector.broadcast %6 : vector<1x16xf32> to vector<128x16xf32>
    %8 = arith.addf %5, %7 : vector<128x16xf32>
    %cst_7 = arith.constant 0.000000e+00 : f32
    %9 = vector.broadcast %cst_7 : f32 to vector<128x16xf32>
    %10 = arith.maximumf %8, %9 : vector<128x16xf32>
    %c0_8 = arith.constant 0 : index
    %c0_9 = arith.constant 0 : index
    %11 = vector.load %arg5[%c0_8, %c0_9] : memref<128x16xf32, #tpu.memory_space<vmem>>, vector<128x16xf32>
    tpu.vector_store %arg5[%c0_8, %c0_9], %10 {strides = array<i32>} : memref<128x16xf32, #tpu.memory_space<vmem>>, vector<128x16xf32>,
    return
  }
  func.func @transform_0(%arg0: i32) -> (i32, i32) {
    %c0_i32 = arith.constant 0 : i32
    %c0_i32_0 = arith.constant 0 : i32
    return %arg0, %c0_i32 : i32, i32
  }
  func.func @transform_1(%arg0: i32) -> (i32, i32) {
    %c0_i32 = arith.constant 0 : i32
    %c0_i32_0 = arith.constant 0 : i32
    %c0_i32_1 = arith.constant 0 : i32
    return %c0_i32, %c0_i32_0 : i32, i32
  }
  func.func @transform_2(%arg0: i32) -> (i32, i32) {
    %c0_i32 = arith.constant 0 : i32
    %c0_i32_0 = arith.constant 0 : i32
    %c0_i32_1 = arith.constant 0 : i32
    return %c0_i32, %c0_i32_0 : i32, i32
  }
  func.func @transform_3(%arg0: i32) -> (i32, i32) {
    %c0_i32 = arith.constant 0 : i32
    %c0_i32_0 = arith.constant 0 : i32
    %c0_i32_1 = arith.constant 0 : i32
    return %c0_i32, %c0_i32_0 : i32, i32
  }
  func.func @transform_4(%arg0: i32) -> (i32, i32) {
    %c0_i32 = arith.constant 0 : i32
    %c0_i32_0 = arith.constant 0 : i32
    return %arg0, %c0_i32 : i32, i32
  }
}

module attributes {stable_mosaic.version = 11 : i64} {
  func.func @_matmul_bn_add_relu_kernel(%arg0: i32, %arg1: memref<128x16xf32, #tpu.memory_space<vmem>>, %arg2: memref<16x64xf32, #tpu.memory_space<vmem>>, %arg3: memref<1x64xf32, #tpu.memory_space<vmem>>, %arg4: memref<1x64xf32, #tpu.memory_space<vmem>>, %arg5: memref<128x64xf32, #tpu.memory_space<vmem>>, %arg6: memref<128x64xf32, #tpu.memory_space<vmem>>) attributes {dimension_semantics = [#tpu.dimension_semantics<parallel>], iteration_bounds = array<i64: 1>, scalar_prefetch = 0 : i64, scratch_operands = 0 : i64, tpu.core_type = #tpu.core_type<tc>, window_params = [{transform_indices = @transform_0, window_bounds = array<i64: 128, 16>}, {pipeline_mode = #tpu.pipeline_mode<synchronous>, transform_indices = @transform_1, window_bounds = array<i64: 16, 64>}, {pipeline_mode = #tpu.pipeline_mode<synchronous>, transform_indices = @transform_2, window_bounds = array<i64: 1, 64>}, {pipeline_mode = #tpu.pipeline_mode<synchronous>, transform_indices = @transform_3, window_bounds = array<i64: 1, 64>}, {transform_indices = @transform_4, window_bounds = array<i64: 128, 64>}, {transform_indices = @transform_5, window_bounds = array<i64: 128, 64>}]} {
    %c0 = arith.constant 0 : index
    %c0_0 = arith.constant 0 : index
    %0 = vector.load %arg1[%c0, %c0_0] : memref<128x16xf32, #tpu.memory_space<vmem>>, vector<128x16xf32>
    %c0_1 = arith.constant 0 : index
    %c0_2 = arith.constant 0 : index
    %1 = vector.load %arg2[%c0_1, %c0_2] : memref<16x64xf32, #tpu.memory_space<vmem>>, vector<16x64xf32>
    %cst = arith.constant dense<0.000000e+00> : vector<128x64xf32>
    %2 = tpu.matmul %0, %1, %cst {dimension_numbers = #tpu.dot_dimension_numbers<[1], [0], [0], [1], [0, 0, 1, 1], [], []>} : vector<128x16xf32>, vector<16x64xf32>, vector<128x64xf32> -> vector<128x64xf32>
    %c0_3 = arith.constant 0 : index
    %c0_4 = arith.constant 0 : index
    %3 = vector.load %arg3[%c0_3, %c0_4] : memref<1x64xf32, #tpu.memory_space<vmem>>, vector<1x64xf32>
    %4 = vector.broadcast %3 : vector<1x64xf32> to vector<128x64xf32>
    %5 = arith.mulf %2, %4 : vector<128x64xf32>
    %c0_5 = arith.constant 0 : index
    %c0_6 = arith.constant 0 : index
    %6 = vector.load %arg4[%c0_5, %c0_6] : memref<1x64xf32, #tpu.memory_space<vmem>>, vector<1x64xf32>
    %7 = vector.broadcast %6 : vector<1x64xf32> to vector<128x64xf32>
    %8 = arith.addf %5, %7 : vector<128x64xf32>
    %c0_7 = arith.constant 0 : index
    %c0_8 = arith.constant 0 : index
    %9 = vector.load %arg5[%c0_7, %c0_8] : memref<128x64xf32, #tpu.memory_space<vmem>>, vector<128x64xf32>
    %10 = arith.addf %8, %9 : vector<128x64xf32>
    %cst_9 = arith.constant 0.000000e+00 : f32
    %11 = vector.broadcast %cst_9 : f32 to vector<128x64xf32>
    %12 = arith.maximumf %10, %11 : vector<128x64xf32>
    %c0_10 = arith.constant 0 : index
    %c0_11 = arith.constant 0 : index
    %13 = vector.load %arg6[%c0_10, %c0_11] : memref<128x64xf32, #tpu.memory_space<vmem>>, vector<128x64xf32>
    tpu.vector_store %arg6[%c0_10, %c0_11], %12 {strides = array<i32>} : memref<128x64xf32, #tpu.memory_space<vmem>>, vector<128x64xf32>,
    return
  }
  func.func @transform_0(%arg0: i32) -> (i32, i32) {
    %c0_i32 = arith.constant 0 : i32
    %c0_i32_0 = arith.constant 0 : i32
    return %arg0, %c0_i32 : i32, i32
  }
  func.func @transform_1(%arg0: i32) -> (i32, i32) {
    %c0_i32 = arith.constant 0 : i32
    %c0_i32_0 = arith.constant 0 : i32
    %c0_i32_1 = arith.constant 0 : i32
    return %c0_i32, %c0_i32_0 : i32, i32
  }
  func.func @transform_2(%arg0: i32) -> (i32, i32) {
    %c0_i32 = arith.constant 0 : i32
    %c0_i32_0 = arith.constant 0 : i32
    %c0_i32_1 = arith.constant 0 : i32
    return %c0_i32, %c0_i32_0 : i32, i32
  }
  func.func @transform_3(%arg0: i32) -> (i32, i32) {
    %c0_i32 = arith.constant 0 : i32
    %c0_i32_0 = arith.constant 0 : i32
    %c0_i32_1 = arith.constant 0 : i32
    return %c0_i32, %c0_i32_0 : i32, i32
  }
  func.func @transform_4(%arg0: i32) -> (i32, i32) {
    %c0_i32 = arith.constant 0 : i32
    %c0_i32_0 = arith.constant 0 : i32
    return %arg0, %c0_i32 : i32, i32
  }
  func.func @transform_5(%arg0: i32) -> (i32, i32) {
    %c0_i32 = arith.constant 0 : i32
    %c0_i32_0 = arith.constant 0 : i32
    return %arg0, %c0_i32 : i32, i32
  }
}

module attributes {stable_mosaic.version = 11 : i64} {
  func.func @_conv3x3_bn_relu_kernel(%arg0: i32, %arg1: i32, %arg2: memref<1x1x10x16xf32, #tpu.memory_space<vmem>>, %arg3: memref<1x1x10x16xf32, #tpu.memory_space<vmem>>, %arg4: memref<1x1x10x16xf32, #tpu.memory_space<vmem>>, %arg5: memref<9x16x16xf32, #tpu.memory_space<vmem>>, %arg6: memref<1x16xf32, #tpu.memory_space<vmem>>, %arg7: memref<1x16xf32, #tpu.memory_space<vmem>>, %arg8: memref<1x1x8x16xf32, #tpu.memory_space<vmem>>) attributes {dimension_semantics = [#tpu.dimension_semantics<parallel>, #tpu.dimension_semantics<parallel>], iteration_bounds = array<i64: 2, 8>, scalar_prefetch = 0 : i64, scratch_operands = 0 : i64, tpu.core_type = #tpu.core_type<tc>, window_params = [{transform_indices = @transform_0, window_bounds = array<i64: 1, 1, 10, 16>}, {transform_indices = @transform_1, window_bounds = array<i64: 1, 1, 10, 16>}, {transform_indices = @transform_2, window_bounds = array<i64: 1, 1, 10, 16>}, {pipeline_mode = #tpu.pipeline_mode<synchronous>, transform_indices = @transform_3, window_bounds = array<i64: 9, 16, 16>}, {pipeline_mode = #tpu.pipeline_mode<synchronous>, transform_indices = @transform_4, window_bounds = array<i64: 1, 16>}, {pipeline_mode = #tpu.pipeline_mode<synchronous>, transform_indices = @transform_5, window_bounds = array<i64: 1, 16>}, {transform_indices = @transform_6, window_bounds = array<i64: 1, 1, 8, 16>}]} {
    %c0 = arith.constant 0 : index
    %c0_0 = arith.constant 0 : index
    %c0_1 = arith.constant 0 : index
    %c0_2 = arith.constant 0 : index
    %0 = vector.load %arg2[%c0, %c0_0, %c0_1, %c0_2] : memref<1x1x10x16xf32, #tpu.memory_space<vmem>>, vector<1x1x10x16xf32>
    %1 = vector.shape_cast %0 : vector<1x1x10x16xf32> to vector<10x16xf32>
    %c0_3 = arith.constant 0 : index
    %c0_4 = arith.constant 0 : index
    %c0_5 = arith.constant 0 : index
    %c0_6 = arith.constant 0 : index
    %2 = vector.load %arg3[%c0_3, %c0_4, %c0_5, %c0_6] : memref<1x1x10x16xf32, #tpu.memory_space<vmem>>, vector<1x1x10x16xf32>
    %3 = vector.shape_cast %2 : vector<1x1x10x16xf32> to vector<10x16xf32>
    %c0_7 = arith.constant 0 : index
    %c0_8 = arith.constant 0 : index
    %c0_9 = arith.constant 0 : index
    %c0_10 = arith.constant 0 : index
    %4 = vector.load %arg4[%c0_7, %c0_8, %c0_9, %c0_10] : memref<1x1x10x16xf32, #tpu.memory_space<vmem>>, vector<1x1x10x16xf32>
    %5 = vector.shape_cast %4 : vector<1x1x10x16xf32> to vector<10x16xf32>
    %cst = arith.constant 0.000000e+00 : f32
    %6 = vector.broadcast %cst : f32 to vector<8x16xf32>
    %7 = vector.extract_strided_slice %1 {offsets = [0, 0], sizes = [8, 16], strides = [1, 1]} : vector<10x16xf32> to vector<8x16xf32>
    %c0_11 = arith.constant 0 : index
    %c0_12 = arith.constant 0 : index
    %c0_13 = arith.constant 0 : index
    %8 = vector.load %arg5[%c0_11, %c0_12, %c0_13] : memref<9x16x16xf32, #tpu.memory_space<vmem>>, vector<1x16x16xf32>
    %9 = vector.shape_cast %8 : vector<1x16x16xf32> to vector<16x16xf32>
    %cst_14 = arith.constant dense<0.000000e+00> : vector<8x16xf32>
    %10 = tpu.matmul %7, %9, %cst_14 {dimension_numbers = #tpu.dot_dimension_numbers<[1], [0], [0], [1], [0, 0, 1, 1], [], []>} : vector<8x16xf32>, vector<16x16xf32>, vector<8x16xf32> -> vector<8x16xf32>
    %11 = arith.addf %6, %10 : vector<8x16xf32>
    %12 = vector.extract_strided_slice %1 {offsets = [1, 0], sizes = [8, 16], strides = [1, 1]} : vector<10x16xf32> to vector<8x16xf32>
    %c1 = arith.constant 1 : index
    %c0_15 = arith.constant 0 : index
    %c0_16 = arith.constant 0 : index
    %13 = vector.load %arg5[%c1, %c0_15, %c0_16] : memref<9x16x16xf32, #tpu.memory_space<vmem>>, vector<1x16x16xf32>
    %14 = vector.shape_cast %13 : vector<1x16x16xf32> to vector<16x16xf32>
    %cst_17 = arith.constant dense<0.000000e+00> : vector<8x16xf32>
    %15 = tpu.matmul %12, %14, %cst_17 {dimension_numbers = #tpu.dot_dimension_numbers<[1], [0], [0], [1], [0, 0, 1, 1], [], []>} : vector<8x16xf32>, vector<16x16xf32>, vector<8x16xf32> -> vector<8x16xf32>
    %16 = arith.addf %11, %15 : vector<8x16xf32>
    %17 = vector.extract_strided_slice %1 {offsets = [2, 0], sizes = [8, 16], strides = [1, 1]} : vector<10x16xf32> to vector<8x16xf32>
    %c2 = arith.constant 2 : index
    %c0_18 = arith.constant 0 : index
    %c0_19 = arith.constant 0 : index
    %18 = vector.load %arg5[%c2, %c0_18, %c0_19] : memref<9x16x16xf32, #tpu.memory_space<vmem>>, vector<1x16x16xf32>
    %19 = vector.shape_cast %18 : vector<1x16x16xf32> to vector<16x16xf32>
    %cst_20 = arith.constant dense<0.000000e+00> : vector<8x16xf32>
    %20 = tpu.matmul %17, %19, %cst_20 {dimension_numbers = #tpu.dot_dimension_numbers<[1], [0], [0], [1], [0, 0, 1, 1], [], []>} : vector<8x16xf32>, vector<16x16xf32>, vector<8x16xf32> -> vector<8x16xf32>
    %21 = arith.addf %16, %20 : vector<8x16xf32>
    %22 = vector.extract_strided_slice %3 {offsets = [0, 0], sizes = [8, 16], strides = [1, 1]} : vector<10x16xf32> to vector<8x16xf32>
    %c3 = arith.constant 3 : index
    %c0_21 = arith.constant 0 : index
    %c0_22 = arith.constant 0 : index
    %23 = vector.load %arg5[%c3, %c0_21, %c0_22] : memref<9x16x16xf32, #tpu.memory_space<vmem>>, vector<1x16x16xf32>
    %24 = vector.shape_cast %23 : vector<1x16x16xf32> to vector<16x16xf32>
    %cst_23 = arith.constant dense<0.000000e+00> : vector<8x16xf32>
    %25 = tpu.matmul %22, %24, %cst_23 {dimension_numbers = #tpu.dot_dimension_numbers<[1], [0], [0], [1], [0, 0, 1, 1], [], []>} : vector<8x16xf32>, vector<16x16xf32>, vector<8x16xf32> -> vector<8x16xf32>
    %26 = arith.addf %21, %25 : vector<8x16xf32>
    %27 = vector.extract_strided_slice %3 {offsets = [1, 0], sizes = [8, 16], strides = [1, 1]} : vector<10x16xf32> to vector<8x16xf32>
    %c4 = arith.constant 4 : index
    %c0_24 = arith.constant 0 : index
    %c0_25 = arith.constant 0 : index
    %28 = vector.load %arg5[%c4, %c0_24, %c0_25] : memref<9x16x16xf32, #tpu.memory_space<vmem>>, vector<1x16x16xf32>
    %29 = vector.shape_cast %28 : vector<1x16x16xf32> to vector<16x16xf32>
    %cst_26 = arith.constant dense<0.000000e+00> : vector<8x16xf32>
    %30 = tpu.matmul %27, %29, %cst_26 {dimension_numbers = #tpu.dot_dimension_numbers<[1], [0], [0], [1], [0, 0, 1, 1], [], []>} : vector<8x16xf32>, vector<16x16xf32>, vector<8x16xf32> -> vector<8x16xf32>
    %31 = arith.addf %26, %30 : vector<8x16xf32>
    %32 = vector.extract_strided_slice %3 {offsets = [2, 0], sizes = [8, 16], strides = [1, 1]} : vector<10x16xf32> to vector<8x16xf32>
    %c5 = arith.constant 5 : index
    %c0_27 = arith.constant 0 : index
    %c0_28 = arith.constant 0 : index
    %33 = vector.load %arg5[%c5, %c0_27, %c0_28] : memref<9x16x16xf32, #tpu.memory_space<vmem>>, vector<1x16x16xf32>
    %34 = vector.shape_cast %33 : vector<1x16x16xf32> to vector<16x16xf32>
    %cst_29 = arith.constant dense<0.000000e+00> : vector<8x16xf32>
    %35 = tpu.matmul %32, %34, %cst_29 {dimension_numbers = #tpu.dot_dimension_numbers<[1], [0], [0], [1], [0, 0, 1, 1], [], []>} : vector<8x16xf32>, vector<16x16xf32>, vector<8x16xf32> -> vector<8x16xf32>
    %36 = arith.addf %31, %35 : vector<8x16xf32>
    %37 = vector.extract_strided_slice %5 {offsets = [0, 0], sizes = [8, 16], strides = [1, 1]} : vector<10x16xf32> to vector<8x16xf32>
    %c6 = arith.constant 6 : index
    %c0_30 = arith.constant 0 : index
    %c0_31 = arith.constant 0 : index
    %38 = vector.load %arg5[%c6, %c0_30, %c0_31] : memref<9x16x16xf32, #tpu.memory_space<vmem>>, vector<1x16x16xf32>
    %39 = vector.shape_cast %38 : vector<1x16x16xf32> to vector<16x16xf32>
    %cst_32 = arith.constant dense<0.000000e+00> : vector<8x16xf32>
    %40 = tpu.matmul %37, %39, %cst_32 {dimension_numbers = #tpu.dot_dimension_numbers<[1], [0], [0], [1], [0, 0, 1, 1], [], []>} : vector<8x16xf32>, vector<16x16xf32>, vector<8x16xf32> -> vector<8x16xf32>
    %41 = arith.addf %36, %40 : vector<8x16xf32>
    %42 = vector.extract_strided_slice %5 {offsets = [1, 0], sizes = [8, 16], strides = [1, 1]} : vector<10x16xf32> to vector<8x16xf32>
    %c7 = arith.constant 7 : index
    %c0_33 = arith.constant 0 : index
    %c0_34 = arith.constant 0 : index
    %43 = vector.load %arg5[%c7, %c0_33, %c0_34] : memref<9x16x16xf32, #tpu.memory_space<vmem>>, vector<1x16x16xf32>
    %44 = vector.shape_cast %43 : vector<1x16x16xf32> to vector<16x16xf32>
    %cst_35 = arith.constant dense<0.000000e+00> : vector<8x16xf32>
    %45 = tpu.matmul %42, %44, %cst_35 {dimension_numbers = #tpu.dot_dimension_numbers<[1], [0], [0], [1], [0, 0, 1, 1], [], []>} : vector<8x16xf32>, vector<16x16xf32>, vector<8x16xf32> -> vector<8x16xf32>
    %46 = arith.addf %41, %45 : vector<8x16xf32>
    %47 = vector.extract_strided_slice %5 {offsets = [2, 0], sizes = [8, 16], strides = [1, 1]} : vector<10x16xf32> to vector<8x16xf32>
    %c8 = arith.constant 8 : index
    %c0_36 = arith.constant 0 : index
    %c0_37 = arith.constant 0 : index
    %48 = vector.load %arg5[%c8, %c0_36, %c0_37] : memref<9x16x16xf32, #tpu.memory_space<vmem>>, vector<1x16x16xf32>
    %49 = vector.shape_cast %48 : vector<1x16x16xf32> to vector<16x16xf32>
    %cst_38 = arith.constant dense<0.000000e+00> : vector<8x16xf32>
    %50 = tpu.matmul %47, %49, %cst_38 {dimension_numbers = #tpu.dot_dimension_numbers<[1], [0], [0], [1], [0, 0, 1, 1], [], []>} : vector<8x16xf32>, vector<16x16xf32>, vector<8x16xf32> -> vector<8x16xf32>
    %51 = arith.addf %46, %50 : vector<8x16xf32>
    %c0_39 = arith.constant 0 : index
    %c0_40 = arith.constant 0 : index
    %52 = vector.load %arg6[%c0_39, %c0_40] : memref<1x16xf32, #tpu.memory_space<vmem>>, vector<1x16xf32>
    %53 = vector.broadcast %52 : vector<1x16xf32> to vector<8x16xf32>
    %54 = arith.mulf %51, %53 : vector<8x16xf32>
    %c0_41 = arith.constant 0 : index
    %c0_42 = arith.constant 0 : index
    %55 = vector.load %arg7[%c0_41, %c0_42] : memref<1x16xf32, #tpu.memory_space<vmem>>, vector<1x16xf32>
    %56 = vector.broadcast %55 : vector<1x16xf32> to vector<8x16xf32>
    %57 = arith.addf %54, %56 : vector<8x16xf32>
    %cst_43 = arith.constant 0.000000e+00 : f32
    %58 = vector.broadcast %cst_43 : f32 to vector<8x16xf32>
    %59 = arith.maximumf %57, %58 : vector<8x16xf32>
    %c0_44 = arith.constant 0 : index
    %c0_45 = arith.constant 0 : index
    %c0_46 = arith.constant 0 : index
    %c0_47 = arith.constant 0 : index
    %60 = vector.load %arg8[%c0_44, %c0_45, %c0_46, %c0_47] : memref<1x1x8x16xf32, #tpu.memory_space<vmem>>, vector<1x1x8x16xf32>
    %61 = vector.shape_cast %60 : vector<1x1x8x16xf32> to vector<8x16xf32>
    %62 = vector.shape_cast %59 : vector<8x16xf32> to vector<1x1x8x16xf32>
    tpu.vector_store %arg8[%c0_44, %c0_45, %c0_46, %c0_47], %62 {strides = array<i32>} : memref<1x1x8x16xf32, #tpu.memory_space<vmem>>, vector<1x1x8x16xf32>,
    return
  }
  func.func @transform_0(%arg0: i32, %arg1: i32) -> (i32, i32, i32, i32) {
    %c0_i32 = arith.constant 0 : i32
    %0 = arith.addi %arg1, %c0_i32 : i32
    %c0_i32_0 = arith.constant 0 : i32
    %c0_i32_1 = arith.constant 0 : i32
    %c0_i32_2 = arith.constant 0 : i32
    return %arg0, %0, %c0_i32_0, %c0_i32_1 : i32, i32, i32, i32
  }
  func.func @transform_1(%arg0: i32, %arg1: i32) -> (i32, i32, i32, i32) {
    %c1_i32 = arith.constant 1 : i32
    %0 = arith.addi %arg1, %c1_i32 : i32
    %c0_i32 = arith.constant 0 : i32
    %c0_i32_0 = arith.constant 0 : i32
    %c0_i32_1 = arith.constant 0 : i32
    return %arg0, %0, %c0_i32, %c0_i32_0 : i32, i32, i32, i32
  }
  func.func @transform_2(%arg0: i32, %arg1: i32) -> (i32, i32, i32, i32) {
    %c2_i32 = arith.constant 2 : i32
    %0 = arith.addi %arg1, %c2_i32 : i32
    %c0_i32 = arith.constant 0 : i32
    %c0_i32_0 = arith.constant 0 : i32
    %c0_i32_1 = arith.constant 0 : i32
    return %arg0, %0, %c0_i32, %c0_i32_0 : i32, i32, i32, i32
  }
  func.func @transform_3(%arg0: i32, %arg1: i32) -> (i32, i32, i32) {
    %c0_i32 = arith.constant 0 : i32
    %c0_i32_0 = arith.constant 0 : i32
    %c0_i32_1 = arith.constant 0 : i32
    %c0_i32_2 = arith.constant 0 : i32
    return %c0_i32, %c0_i32_0, %c0_i32_1 : i32, i32, i32
  }
  func.func @transform_4(%arg0: i32, %arg1: i32) -> (i32, i32) {
    %c0_i32 = arith.constant 0 : i32
    %c0_i32_0 = arith.constant 0 : i32
    %c0_i32_1 = arith.constant 0 : i32
    return %c0_i32, %c0_i32_0 : i32, i32
  }
  func.func @transform_5(%arg0: i32, %arg1: i32) -> (i32, i32) {
    %c0_i32 = arith.constant 0 : i32
    %c0_i32_0 = arith.constant 0 : i32
    %c0_i32_1 = arith.constant 0 : i32
    return %c0_i32, %c0_i32_0 : i32, i32
  }
  func.func @transform_6(%arg0: i32, %arg1: i32) -> (i32, i32, i32, i32) {
    %c0_i32 = arith.constant 0 : i32
    %c0_i32_0 = arith.constant 0 : i32
    %c0_i32_1 = arith.constant 0 : i32
    return %arg0, %arg1, %c0_i32, %c0_i32_0 : i32, i32, i32, i32
  }
}

</mosaic_0001>

<llo_original>
// kernel: bottleneck_pallas.3
$region0: #{bottleneck_pallas.3}
  #allocation0 [shape = 'u32[]', space=smem, size = 0x4, offset = 0x4, fixed_abs, tag = 'smem constant byte address 0x4 - core index']
  #allocation1 [shape = 'u32[144,128]{1,0:T(1,128)}', space=vmem, size = 0x12000, scoped, tag = 'internal scratch']
  %s0 = inlined_call_operand.vmem [shape: f32[128,64], index: 0, kind: input, shape index: {}]
  %s1 = inlined_call_operand.vmem [shape: f32[64,16], index: 1, kind: input, shape index: {}]
  %s2 = inlined_call_operand.vmem [shape: f32[1,16], index: 2, kind: input, shape index: {}]
  %s3 = inlined_call_operand.vmem [shape: f32[1,16], index: 3, kind: input, shape index: {}]
  %s4 = inlined_call_operand.vmem [shape: f32[128,16], index: 4, kind: output, shape index: {}]
  %s5 = sld [smem:[#allocation0]]
  $region26: #{bottleneck_pallas.3} parent=0
    _
  %s7 = ssub.s32 1, %s5
  %s8 = scalar_select 0, %s7, %s5
  // Predicated region
  $region2: #{bottleneck_pallas.3} parent=0 // pred_check
    _
  $region3: #{bottleneck_pallas.3} parent=0 // pred_check_branch
    %10 = sbr.rel (0) target = $region5
  $region4: #{bottleneck_pallas.3} parent=0 // pred_region
    _
  $region5: #{bottleneck_pallas.3} parent=0 // pred_fallthru
    _
  // Predicated region
  $region6: #{bottleneck_pallas.3} parent=0 // pred_check
    _
  $region7: #{bottleneck_pallas.3} parent=0 // pred_check_branch
    %12 = sbr.rel (0) target = $region9
  $region8: #{bottleneck_pallas.3} parent=0 // pred_region
    _
  $region9: #{bottleneck_pallas.3} parent=0 // pred_fallthru
    _
  // Predicated region
  $region10: #{bottleneck_pallas.3} parent=0 // pred_check
    _
  $region11: #{bottleneck_pallas.3} parent=0 // pred_check_branch
    %14 = sbr.rel (0) target = $region13
  $region12: #{bottleneck_pallas.3} parent=0 // pred_region
    _
  $region13: #{bottleneck_pallas.3} parent=0 // pred_fallthru
    _
  // Predicated region
  $region14: #{bottleneck_pallas.3} parent=0 // pred_check
    _
  $region15: #{bottleneck_pallas.3} parent=0 // pred_check_branch
    %16 = sbr.rel (0) target = $region17
  $region16: #{bottleneck_pallas.3} parent=0 // pred_region
    _
  $region17: #{bottleneck_pallas.3} parent=0 // pred_fallthru
    _
  %v17 = vld [vmem:[%s0] sm:$0xff]
  %v18 = vld [vmem:[%s0 + $0x8] sm:$0xff]
  %v19 = vld [vmem:[%s0 + $0x10] sm:$0xff]
  %v20 = vld [vmem:[%s0 + $0x18] sm:$0xff]
  %v21 = vld [vmem:[%s0 + $0x20] sm:$0xff]
  %v22 = vld [vmem:[%s0 + $0x28] sm:$0xff]
  %v23 = vld [vmem:[%s0 + $0x30] sm:$0xff]
  %v24 = vld [vmem:[%s0 + $0x38] sm:$0xff]
  %v25 = vld [vmem:[%s0 + $0x40] sm:$0xff]
  %v26 = vld [vmem:[%s0 + $0x48] sm:$0xff]
  %v27 = vld [vmem:[%s0 + $0x50] sm:$0xff]
  %v28 = vld [vmem:[%s0 + $0x58] sm:$0xff]
  %v29 = vld [vmem:[%s0 + $0x60] sm:$0xff]
  %v30 = vld [vmem:[%s0 + $0x68] sm:$0xff]
  %v31 = vld [vmem:[%s0 + $0x70] sm:$0xff]
  %v32 = vld [vmem:[%s0 + $0x78] sm:$0xff]
  %v33 = vld [vmem:[%s1] sm:$0xff]
  %v34 = vld [vmem:[%s1 + $0x8] sm:$0xff]
  %v35 = vld [vmem:[%s1 + $0x10] sm:$0xff]
  %v36 = vld [vmem:[%s1 + $0x18] sm:$0xff]
  %v37 = vld [vmem:[%s1 + $0x20] sm:$0xff]
  %v38 = vld [vmem:[%s1 + $0x28] sm:$0xff]
  %v39 = vld [vmem:[%s1 + $0x30] sm:$0xff]
  %v40 = vld [vmem:[%s1 + $0x38] sm:$0xff]
  %vm41 = vcmask 523264
  %v43 = vsel %vm41, %v17, 0
  %v46 = vsel %vm41, %v18, 0
  %v49 = vsel %vm41, %v19, 0
  %v52 = vsel %vm41, %v20, 0
  %v55 = vsel %vm41, %v21, 0
  %v58 = vsel %vm41, %v22, 0
  %v61 = vsel %vm41, %v23, 0
  %v64 = vsel %vm41, %v24, 0
  %v67 = vsel %vm41, %v25, 0
  %v70 = vsel %vm41, %v26, 0
  %v73 = vsel %vm41, %v27, 0
  %v76 = vsel %vm41, %v28, 0
  %v79 = vsel %vm41, %v29, 0
  %v82 = vsel %vm41, %v30, 0
  %v85 = vsel %vm41, %v31, 0
  %v88 = vsel %vm41, %v32, 0
  %90 = vmatprep.subr.mxu0 0.0
  %91 = vmatpush1.msra.mxu0 %v33
  %92 = vmatprep.subr.mxu0 0.0
  %93 = vmatpush1.msra.mxu0 %v34
  %94 = vmatprep.subr.mxu0 0.0
  %95 = vmatpush1.msra.mxu0 %v35
  %96 = vmatprep.subr.mxu0 0.0
  %97 = vmatpush1.msra.mxu0 %v36
  %98 = vmatprep.subr.mxu0 0.0
  %99 = vmatpush1.msra.mxu0 %v37
  %100 = vmatprep.subr.mxu0 0.0
  %101 = vmatpush1.msra.mxu0 %v38
  %102 = vmatprep.subr.mxu0 0.0
  %103 = vmatpush1.msra.mxu0 %v39
  %104 = vmatprep.subr.mxu0 0.0
  %105 = vmatpush1.msra.mxu0 %v40
  %106 = vmatprep.subr.mxu0 0.0
  %107 = vmatpush1.msra.mxu0 0.0
  %108 = vmatprep.subr.mxu0 0.0
  %109 = vmatpush1.msra.mxu0 0.0
  %110 = vmatprep.subr.mxu0 0.0
  %111 = vmatpush1.msra.mxu0 0.0
  %112 = vmatprep.subr.mxu0 0.0
  %113 = vmatpush1.msra.mxu0 0.0
  %114 = vmatprep.subr.mxu0 0.0
  %115 = vmatpush1.msra.mxu0 0.0
  %116 = vmatprep.subr.mxu0 0.0
  %117 = vmatpush1.msra.mxu0 0.0
  %118 = vmatprep.subr.mxu0 0.0
  %119 = vmatpush1.msra.mxu0 0.0
  %120 = vmatprep.subr.mxu0 0.0
  %121 = vmatpush1.msra.mxu0 0.0
  %122 = vmatprep.subr.mxu0 0.0
  %123 = vmatpush1.msra.mxu0 0.0
  %124 = vmatprep.subr.mxu0 0.0
  %125 = vmatpush1.msra.mxu0 0.0
  %126 = vmatprep.subr.mxu0 0.0
  %127 = vmatpush1.msra.mxu0 0.0
  %128 = vmatprep.subr.mxu0 0.0
  %129 = vmatpush1.msra.mxu0 0.0
  %130 = vmatprep.subr.mxu0 0.0
  %131 = vmatpush1.msra.mxu0 0.0
  %132 = vmatprep.subr.mxu0 0.0
  %133 = vmatpush1.msra.mxu0 0.0
  %134 = vmatprep.subr.mxu0 0.0
  %135 = vmatpush1.msra.mxu0 0.0
  %136 = vmatprep.subr.mxu0 0.0
  %137 = vmatpush1.msra.mxu0 0.0
  %138 = vmatprep.subr.mxu0 0.0
  %139 = vmatpush1.msra.mxu0 0.0
  %140 = vmatprep.subr.mxu0 0.0
  %141 = vmatpush1.msra.mxu0 0.0
  %142 = vmatprep.subr.mxu0 0.0
  %143 = vmatpush1.msra.mxu0 0.0
  %144 = vmatprep.subr.mxu0 0.0
  %145 = vmatpush1.msra.mxu0 0.0
  %146 = vmatprep.subr.mxu0 0.0
  %147 = vmatpush1.msra.mxu0 0.0
  %148 = vmatprep.subr.mxu0 0.0
  %149 = vmatpush1.msra.mxu0 0.0
  %150 = vmatprep.subr.mxu0 0.0
  %151 = vmatpush1.msra.mxu0 0.0
  %152 = vmatprep.subr.mxu0 0.0
  %153 = vmatpush1.msra.mxu0 0.0
  %154 = vmatprep.mubr.f32.mxu0 0.0
  %155 = vmatmul.mubr.f32.gmra.mrb[0].mxu0 %v43
  %v156 = vpop.f32.mrb[0].mxu0
  %v157 = vadd.f32 0.0, %v156
  %v158 = vpop.f32.mrb[0].mxu0
  %159 = vmatprep.mubr.f32.mxu0 0.0
  %160 = vmatmul.mubr.f32.gmra.mrb[0].mxu0 %v46
  %v161 = vpop.f32.mrb[0].mxu0
  %v162 = vadd.f32 0.0, %v161
  %v163 = vpop.f32.mrb[0].mxu0
  %164 = vmatprep.mubr.f32.mxu0 0.0
  %165 = vmatmul.mubr.f32.gmra.mrb[0].mxu0 %v49
  %v166 = vpop.f32.mrb[0].mxu0
  %v167 = vadd.f32 0.0, %v166
  %v168 = vpop.f32.mrb[0].mxu0
  %169 = vmatprep.mubr.f32.mxu0 0.0
  %170 = vmatmul.mubr.f32.gmra.mrb[0].mxu0 %v52
  %v171 = vpop.f32.mrb[0].mxu0
  %v172 = vadd.f32 0.0, %v171
  %v173 = vpop.f32.mrb[0].mxu0
  %174 = vmatprep.mubr.f32.mxu0 0.0
  %175 = vmatmul.mubr.f32.gmra.mrb[0].mxu0 %v55
  %v176 = vpop.f32.mrb[0].mxu0
  %v177 = vadd.f32 0.0, %v176
  %v178 = vpop.f32.mrb[0].mxu0
  %179 = vmatprep.mubr.f32.mxu0 0.0
  %180 = vmatmul.mubr.f32.gmra.mrb[0].mxu0 %v58
  %v181 = vpop.f32.mrb[0].mxu0
  %v182 = vadd.f32 0.0, %v181
  %v183 = vpop.f32.mrb[0].mxu0
  %184 = vmatprep.mubr.f32.mxu0 0.0
  %185 = vmatmul.mubr.f32.gmra.mrb[0].mxu0 %v61
  %v186 = vpop.f32.mrb[0].mxu0
  %v187 = vadd.f32 0.0, %v186
  %v188 = vpop.f32.mrb[0].mxu0
  %189 = vmatprep.mubr.f32.mxu0 0.0
  %190 = vmatmul.mubr.f32.gmra.mrb[0].mxu0 %v64
  %v191 = vpop.f32.mrb[0].mxu0
  %v192 = vadd.f32 0.0, %v191
  %v193 = vpop.f32.mrb[0].mxu0
  %194 = vmatprep.mubr.f32.mxu0 0.0
  %195 = vmatmul.mubr.f32.gmra.mrb[0].mxu0 %v67
  %v196 = vpop.f32.mrb[0].mxu0
  %v197 = vadd.f32 0.0, %v196
  %v198 = vpop.f32.mrb[0].mxu0
  %199 = vmatprep.mubr.f32.mxu0 0.0
  %200 = vmatmul.mubr.f32.gmra.mrb[0].mxu0 %v70
  %v201 = vpop.f32.mrb[0].mxu0
  %v202 = vadd.f32 0.0, %v201
  %v203 = vpop.f32.mrb[0].mxu0
  %204 = vmatprep.mubr.f32.mxu0 0.0
  %205 = vmatmul.mubr.f32.gmra.mrb[0].mxu0 %v73
  %v206 = vpop.f32.mrb[0].mxu0
  %v207 = vadd.f32 0.0, %v206
  %v208 = vpop.f32.mrb[0].mxu0
  %209 = vmatprep.mubr.f32.mxu0 0.0
  %210 = vmatmul.mubr.f32.gmra.mrb[0].mxu0 %v76
  %v211 = vpop.f32.mrb[0].mxu0
  %v212 = vadd.f32 0.0, %v211
  %v213 = vpop.f32.mrb[0].mxu0
  %214 = vmatprep.mubr.f32.mxu0 0.0
  %215 = vmatmul.mubr.f32.gmra.mrb[0].mxu0 %v79
  %v216 = vpop.f32.mrb[0].mxu0
  %v217 = vadd.f32 0.0, %v216
  %v218 = vpop.f32.mrb[0].mxu0
  %219 = vmatprep.mubr.f32.mxu0 0.0
  %220 = vmatmul.mubr.f32.gmra.mrb[0].mxu0 %v82
  %v221 = vpop.f32.mrb[0].mxu0
  %v222 = vadd.f32 0.0, %v221
  %v223 = vpop.f32.mrb[0].mxu0
  %224 = vmatprep.mubr.f32.mxu0 0.0
  %225 = vmatmul.mubr.f32.gmra.mrb[0].mxu0 %v85
  %v226 = vpop.f32.mrb[0].mxu0
  %v227 = vadd.f32 0.0, %v226
  %v228 = vpop.f32.mrb[0].mxu0
  %229 = vmatprep.mubr.f32.mxu0 0.0
  %230 = vmatmul.mubr.f32.gmra.mrb[0].mxu0 %v88
  %v231 = vpop.f32.mrb[0].mxu0
  %v232 = vadd.f32 0.0, %v231
  %v233 = vpop.f32.mrb[0].mxu0
  %234 = vdwg.mxu0
  %v235 = vld [vmem:[%s2] sm:$0x1]
  %v237 = vlaneseq
  %v238 = vshrl.u32 %v237, 7
  %v239 = vsub.s32 0, %v238
  %v240 = vrot.slane %v235, %v239
  %v242 = vmul.f32 %v157, %v240
  %v243 = vmul.f32 %v162, %v240
  %v244 = vmul.f32 %v167, %v240
  %v245 = vmul.f32 %v172, %v240
  %v246 = vmul.f32 %v177, %v240
  %v247 = vmul.f32 %v182, %v240
  %v248 = vmul.f32 %v187, %v240
  %v249 = vmul.f32 %v192, %v240
  %v250 = vmul.f32 %v197, %v240
  %v251 = vmul.f32 %v202, %v240
  %v252 = vmul.f32 %v207, %v240
  %v253 = vmul.f32 %v212, %v240
  %v254 = vmul.f32 %v217, %v240
  %v255 = vmul.f32 %v222, %v240
  %v256 = vmul.f32 %v227, %v240
  %v257 = vmul.f32 %v232, %v240
  %v258 = vld [vmem:[%s3] sm:$0x1]
  %v260 = vlaneseq
  %v261 = vshrl.u32 %v260, 7
  %v262 = vsub.s32 0, %v261
  %v263 = vrot.slane %v258, %v262
  %v265 = vadd.f32 %v242, %v263
  %v266 = vadd.f32 %v243, %v263
  %v267 = vadd.f32 %v244, %v263
  %v268 = vadd.f32 %v245, %v263
  %v269 = vadd.f32 %v246, %v263
  %v270 = vadd.f32 %v247, %v263
  %v271 = vadd.f32 %v248, %v263
  %v272 = vadd.f32 %v249, %v263
  %v273 = vadd.f32 %v250, %v263
  %v274 = vadd.f32 %v251, %v263
  %v275 = vadd.f32 %v252, %v263
  %v276 = vadd.f32 %v253, %v263
  %v277 = vadd.f32 %v254, %v263
  %v278 = vadd.f32 %v255, %v263
  %v279 = vadd.f32 %v256, %v263
  %v280 = vadd.f32 %v257, %v263
  %v281 = vmax.f32 %v265, 0.0
  %v282 = vmax.f32 %v266, 0.0
  %v283 = vmax.f32 %v267, 0.0
  %v284 = vmax.f32 %v268, 0.0
  %v285 = vmax.f32 %v269, 0.0
  %v286 = vmax.f32 %v270, 0.0
  %v287 = vmax.f32 %v271, 0.0
  %v288 = vmax.f32 %v272, 0.0
  %v289 = vmax.f32 %v273, 0.0
  %v290 = vmax.f32 %v274, 0.0
  %v291 = vmax.f32 %v275, 0.0
  %v292 = vmax.f32 %v276, 0.0
  %v293 = vmax.f32 %v277, 0.0
  %v294 = vmax.f32 %v278, 0.0
  %v295 = vmax.f32 %v279, 0.0
  %v296 = vmax.f32 %v280, 0.0
  %vm297 = vcmask 130048
  %298 = vst.msk [vmem:[%s4] sm:$0xff] %vm297, %v281
  %299 = vst.msk [vmem:[%s4 + $0x8] sm:$0xff] %vm297, %v282
  %300 = vst.msk [vmem:[%s4 + $0x10] sm:$0xff] %vm297, %v283
  %301 = vst.msk [vmem:[%s4 + $0x18] sm:$0xff] %vm297, %v284
  %302 = vst.msk [vmem:[%s4 + $0x20] sm:$0xff] %vm297, %v285
  %303 = vst.msk [vmem:[%s4 + $0x28] sm:$0xff] %vm297, %v286
  %304 = vst.msk [vmem:[%s4 + $0x30] sm:$0xff] %vm297, %v287
  %305 = vst.msk [vmem:[%s4 + $0x38] sm:$0xff] %vm297, %v288
  %306 = vst.msk [vmem:[%s4 + $0x40] sm:$0xff] %vm297, %v289
  %307 = vst.msk [vmem:[%s4 + $0x48] sm:$0xff] %vm297, %v290
  %308 = vst.msk [vmem:[%s4 + $0x50] sm:$0xff] %vm297, %v291
  %309 = vst.msk [vmem:[%s4 + $0x58] sm:$0xff] %vm297, %v292
  %310 = vst.msk [vmem:[%s4 + $0x60] sm:$0xff] %vm297, %v293
  %311 = vst.msk [vmem:[%s4 + $0x68] sm:$0xff] %vm297, %v294
  %312 = vst.msk [vmem:[%s4 + $0x70] sm:$0xff] %vm297, %v295
  %313 = vst.msk [vmem:[%s4 + $0x78] sm:$0xff] %vm297, %v296
  // Predicated region
  $region18: #{bottleneck_pallas.3} parent=0 // pred_check
    _
  $region19: #{bottleneck_pallas.3} parent=0 // pred_check_branch
    %315 = sbr.rel (0) target = $region21
  $region20: #{bottleneck_pallas.3} parent=0 // pred_region
    _
  $region21: #{bottleneck_pallas.3} parent=0 // pred_fallthru
    _
  // Predicated region
  $region22: #{bottleneck_pallas.3} parent=0 // pred_check
    _
  $region23: #{bottleneck_pallas.3} parent=0 // pred_check_branch
    %317 = sbr.rel (0) target = $region25
  $region24: #{bottleneck_pallas.3} parent=0 // pred_region
    _
  $region25: #{bottleneck_pallas.3} parent=0 // pred_fallthru
    _

// kernel: bottleneck_pallas.5
$region0: #{bottleneck_pallas.5}
  #allocation0 [shape = 'u32[]', space=smem, size = 0x4, offset = 0x4, fixed_abs, tag = 'smem constant byte address 0x4 - core index']
  #allocation1 [shape = 'u32[144,128]{1,0:T(1,128)}', space=vmem, size = 0x12000, scoped, tag = 'internal scratch']
  %s0 = inlined_call_operand.vmem [shape: f32[128,16], index: 0, kind: input, shape index: {}]
  %s1 = inlined_call_operand.vmem [shape: f32[16,64], index: 1, kind: input, shape index: {}]
  %s2 = inlined_call_operand.vmem [shape: f32[1,64], index: 2, kind: input, shape index: {}]
  %s3 = inlined_call_operand.vmem [shape: f32[1,64], index: 3, kind: input, shape index: {}]
  %s4 = inlined_call_operand.vmem [shape: f32[128,64], index: 4, kind: input, shape index: {}]
  %s5 = inlined_call_operand.hbm [shape: f32[128,64], index: 5, kind: output, shape index: {}]
  %s6 = sld [smem:[#allocation0]]
  $region30: #{bottleneck_pallas.5} parent=0
    _
  %s8 = ssub.s32 1, %s6
  %s9 = scalar_select 0, %s8, %s6
  $region1: #{bottleneck_pallas.5} parent=0
    #allocation2 [shape = 'u8[65536]{0}', space=vmem, size = 0x10000, scoped, tag = 'output window, operand 0, single buffered']
    #allocation3 [shape = 's32[1]{0}', space=sflag, size = 0x4, scoped, tag = 'scoped memory for bottleneck_pallas.5']
    %10 = vsyncpa [#allocation3], 0
    // Predicated region
    $region2: #{bottleneck_pallas.5} parent=1 // pred_check
      _
    $region3: #{bottleneck_pallas.5} parent=1 // pred_check_branch
      %12 = sbr.rel (0) target = $region5
    $region4: #{bottleneck_pallas.5} parent=1 // pred_region
      _
    $region5: #{bottleneck_pallas.5} parent=1 // pred_fallthru
      _
    // Predicated region
    $region6: #{bottleneck_pallas.5} parent=1 // pred_check
      _
    $region7: #{bottleneck_pallas.5} parent=1 // pred_check_branch
      %14 = sbr.rel (0) target = $region9
    $region8: #{bottleneck_pallas.5} parent=1 // pred_region
      _
    $region9: #{bottleneck_pallas.5} parent=1 // pred_fallthru
      _
    // Predicated region
    $region10: #{bottleneck_pallas.5} parent=1 // pred_check
      _
    $region11: #{bottleneck_pallas.5} parent=1 // pred_check_branch
      %16 = sbr.rel (0) target = $region13
    $region12: #{bottleneck_pallas.5} parent=1 // pred_region
      _
    $region13: #{bottleneck_pallas.5} parent=1 // pred_fallthru
      _
    // Predicated region
    $region14: #{bottleneck_pallas.5} parent=1 // pred_check
      _
    $region15: #{bottleneck_pallas.5} parent=1 // pred_check_branch
      %18 = sbr.rel (0) target = $region17
    $region16: #{bottleneck_pallas.5} parent=1 // pred_region
      _
    $region17: #{bottleneck_pallas.5} parent=1 // pred_fallthru
      _
    // Predicated region
    $region18: #{bottleneck_pallas.5} parent=1 // pred_check
      _
    $region19: #{bottleneck_pallas.5} parent=1 // pred_check_branch
      %20 = sbr.rel (0) target = $region21
    $region20: #{bottleneck_pallas.5} parent=1 // pred_region
      _
    $region21: #{bottleneck_pallas.5} parent=1 // pred_fallthru
      _
    %v21 = vld [vmem:[%s0] sm:$0xff]
    %v22 = vld [vmem:[%s0 + $0x8] sm:$0xff]
    %v23 = vld [vmem:[%s0 + $0x10] sm:$0xff]
    %v24 = vld [vmem:[%s0 + $0x18] sm:$0xff]
    %v25 = vld [vmem:[%s0 + $0x20] sm:$0xff]
    %v26 = vld [vmem:[%s0 + $0x28] sm:$0xff]
    %v27 = vld [vmem:[%s0 + $0x30] sm:$0xff]
    %v28 = vld [vmem:[%s0 + $0x38] sm:$0xff]
    %v29 = vld [vmem:[%s0 + $0x40] sm:$0xff]
    %v30 = vld [vmem:[%s0 + $0x48] sm:$0xff]
    %v31 = vld [vmem:[%s0 + $0x50] sm:$0xff]
    %v32 = vld [vmem:[%s0 + $0x58] sm:$0xff]
    %v33 = vld [vmem:[%s0 + $0x60] sm:$0xff]
    %v34 = vld [vmem:[%s0 + $0x68] sm:$0xff]
    %v35 = vld [vmem:[%s0 + $0x70] sm:$0xff]
    %v36 = vld [vmem:[%s0 + $0x78] sm:$0xff]
    %v37 = vld [vmem:[%s1] sm:$0xff]
    %v38 = vld [vmem:[%s1 + $0x8] sm:$0xff]
    %vm39 = vcmask 130048
    %v41 = vsel %vm39, %v21, 0
    %v44 = vsel %vm39, %v22, 0
    %v47 = vsel %vm39, %v23, 0
    %v50 = vsel %vm39, %v24, 0
    %v53 = vsel %vm39, %v25, 0
    %v56 = vsel %vm39, %v26, 0
    %v59 = vsel %vm39, %v27, 0
    %v62 = vsel %vm39, %v28, 0
    %v65 = vsel %vm39, %v29, 0
    %v68 = vsel %vm39, %v30, 0
    %v71 = vsel %vm39, %v31, 0
    %v74 = vsel %vm39, %v32, 0
    %v77 = vsel %vm39, %v33, 0
    %v80 = vsel %vm39, %v34, 0
    %v83 = vsel %vm39, %v35, 0
    %v86 = vsel %vm39, %v36, 0
    %88 = vmatprep.subr.mxu0 0.0
    %89 = vmatpush1.msra.mxu0 %v37
    %90 = vmatprep.subr.mxu0 0.0
    %91 = vmatpush1.msra.mxu0 %v38
    %92 = vmatprep.subr.mxu0 0.0
    %93 = vmatpush1.msra.mxu0 0.0
    %94 = vmatprep.subr.mxu0 0.0
    %95 = vmatpush1.msra.mxu0 0.0
    %96 = vmatprep.subr.mxu0 0.0
    %97 = vmatpush1.msra.mxu0 0.0
    %98 = vmatprep.subr.mxu0 0.0
    %99 = vmatpush1.msra.mxu0 0.0
    %100 = vmatprep.subr.mxu0 0.0
    %101 = vmatpush1.msra.mxu0 0.0
    %102 = vmatprep.subr.mxu0 0.0
    %103 = vmatpush1.msra.mxu0 0.0
    %104 = vmatprep.subr.mxu0 0.0
    %105 = vmatpush1.msra.mxu0 0.0
    %106 = vmatprep.subr.mxu0 0.0
    %107 = vmatpush1.msra.mxu0 0.0
    %108 = vmatprep.subr.mxu0 0.0
    %109 = vmatpush1.msra.mxu0 0.0
    %110 = vmatprep.subr.mxu0 0.0
    %111 = vmatpush1.msra.mxu0 0.0
    %112 = vmatprep.subr.mxu0 0.0
    %113 = vmatpush1.msra.mxu0 0.0
    %114 = vmatprep.subr.mxu0 0.0
    %115 = vmatpush1.msra.mxu0 0.0
    %116 = vmatprep.subr.mxu0 0.0
    %117 = vmatpush1.msra.mxu0 0.0
    %118 = vmatprep.subr.mxu0 0.0
    %119 = vmatpush1.msra.mxu0 0.0
    %120 = vmatprep.subr.mxu0 0.0
    %121 = vmatpush1.msra.mxu0 0.0
    %122 = vmatprep.subr.mxu0 0.0
    %123 = vmatpush1.msra.mxu0 0.0
    %124 = vmatprep.subr.mxu0 0.0
    %125 = vmatpush1.msra.mxu0 0.0
    %126 = vmatprep.subr.mxu0 0.0
    %127 = vmatpush1.msra.mxu0 0.0
    %128 = vmatprep.subr.mxu0 0.0
    %129 = vmatpush1.msra.mxu0 0.0
    %130 = vmatprep.subr.mxu0 0.0
    %131 = vmatpush1.msra.mxu0 0.0
    %132 = vmatprep.subr.mxu0 0.0
    %133 = vmatpush1.msra.mxu0 0.0
    %134 = vmatprep.subr.mxu0 0.0
    %135 = vmatpush1.msra.mxu0 0.0
    %136 = vmatprep.subr.mxu0 0.0
    %137 = vmatpush1.msra.mxu0 0.0
    %138 = vmatprep.subr.mxu0 0.0
    %139 = vmatpush1.msra.mxu0 0.0
    %140 = vmatprep.subr.mxu0 0.0
    %141 = vmatpush1.msra.mxu0 0.0
    %142 = vmatprep.subr.mxu0 0.0
    %143 = vmatpush1.msra.mxu0 0.0
    %144 = vmatprep.subr.mxu0 0.0
    %145 = vmatpush1.msra.mxu0 0.0
    %146 = vmatprep.subr.mxu0 0.0
    %147 = vmatpush1.msra.mxu0 0.0
    %148 = vmatprep.subr.mxu0 0.0
    %149 = vmatpush1.msra.mxu0 0.0
    %150 = vmatprep.subr.mxu0 0.0
    %151 = vmatpush1.msra.mxu0 0.0
    %152 = vmatprep.mubr.f32.mxu0 0.0
    %153 = vmatmul.mubr.f32.gmra.mrb[0].mxu0 %v41
    %v154 = vpop.f32.mrb[0].mxu0
    %v155 = vadd.f32 0.0, %v154
    %v156 = vpop.f32.mrb[0].mxu0
    %157 = vmatprep.mubr.f32.mxu0 0.0
    %158 = vmatmul.mubr.f32.gmra.mrb[0].mxu0 %v44
    %v159 = vpop.f32.mrb[0].mxu0
    %v160 = vadd.f32 0.0, %v159
    %v161 = vpop.f32.mrb[0].mxu0
    %162 = vmatprep.mubr.f32.mxu0 0.0
    %163 = vmatmul.mubr.f32.gmra.mrb[0].mxu0 %v47
    %v164 = vpop.f32.mrb[0].mxu0
    %v165 = vadd.f32 0.0, %v164
    %v166 = vpop.f32.mrb[0].mxu0
    %167 = vmatprep.mubr.f32.mxu0 0.0
    %168 = vmatmul.mubr.f32.gmra.mrb[0].mxu0 %v50
    %v169 = vpop.f32.mrb[0].mxu0
    %v170 = vadd.f32 0.0, %v169
    %v171 = vpop.f32.mrb[0].mxu0
    %172 = vmatprep.mubr.f32.mxu0 0.0
    %173 = vmatmul.mubr.f32.gmra.mrb[0].mxu0 %v53
    %v174 = vpop.f32.mrb[0].mxu0
    %v175 = vadd.f32 0.0, %v174
    %v176 = vpop.f32.mrb[0].mxu0
    %177 = vmatprep.mubr.f32.mxu0 0.0
    %178 = vmatmul.mubr.f32.gmra.mrb[0].mxu0 %v56
    %v179 = vpop.f32.mrb[0].mxu0
    %v180 = vadd.f32 0.0, %v179
    %v181 = vpop.f32.mrb[0].mxu0
    %182 = vmatprep.mubr.f32.mxu0 0.0
    %183 = vmatmul.mubr.f32.gmra.mrb[0].mxu0 %v59
    %v184 = vpop.f32.mrb[0].mxu0
    %v185 = vadd.f32 0.0, %v184
    %v186 = vpop.f32.mrb[0].mxu0
    %187 = vmatprep.mubr.f32.mxu0 0.0
    %188 = vmatmul.mubr.f32.gmra.mrb[0].mxu0 %v62
    %v189 = vpop.f32.mrb[0].mxu0
    %v190 = vadd.f32 0.0, %v189
    %v191 = vpop.f32.mrb[0].mxu0
    %192 = vmatprep.mubr.f32.mxu0 0.0
    %193 = vmatmul.mubr.f32.gmra.mrb[0].mxu0 %v65
    %v194 = vpop.f32.mrb[0].mxu0
    %v195 = vadd.f32 0.0, %v194
    %v196 = vpop.f32.mrb[0].mxu0
    %197 = vmatprep.mubr.f32.mxu0 0.0
    %198 = vmatmul.mubr.f32.gmra.mrb[0].mxu0 %v68
    %v199 = vpop.f32.mrb[0].mxu0
    %v200 = vadd.f32 0.0, %v199
    %v201 = vpop.f32.mrb[0].mxu0
    %202 = vmatprep.mubr.f32.mxu0 0.0
    %203 = vmatmul.mubr.f32.gmra.mrb[0].mxu0 %v71
    %v204 = vpop.f32.mrb[0].mxu0
    %v205 = vadd.f32 0.0, %v204
    %v206 = vpop.f32.mrb[0].mxu0
    %207 = vmatprep.mubr.f32.mxu0 0.0
    %208 = vmatmul.mubr.f32.gmra.mrb[0].mxu0 %v74
    %v209 = vpop.f32.mrb[0].mxu0
    %v210 = vadd.f32 0.0, %v209
    %v211 = vpop.f32.mrb[0].mxu0
    %212 = vmatprep.mubr.f32.mxu0 0.0
    %213 = vmatmul.mubr.f32.gmra.mrb[0].mxu0 %v77
    %v214 = vpop.f32.mrb[0].mxu0
    %v215 = vadd.f32 0.0, %v214
    %v216 = vpop.f32.mrb[0].mxu0
    %217 = vmatprep.mubr.f32.mxu0 0.0
    %218 = vmatmul.mubr.f32.gmra.mrb[0].mxu0 %v80
    %v219 = vpop.f32.mrb[0].mxu0
    %v220 = vadd.f32 0.0, %v219
    %v221 = vpop.f32.mrb[0].mxu0
    %222 = vmatprep.mubr.f32.mxu0 0.0
    %223 = vmatmul.mubr.f32.gmra.mrb[0].mxu0 %v83
    %v224 = vpop.f32.mrb[0].mxu0
    %v225 = vadd.f32 0.0, %v224
    %v226 = vpop.f32.mrb[0].mxu0
    %227 = vmatprep.mubr.f32.mxu0 0.0
    %228 = vmatmul.mubr.f32.gmra.mrb[0].mxu0 %v86
    %v229 = vpop.f32.mrb[0].mxu0
    %v230 = vadd.f32 0.0, %v229
    %v231 = vpop.f32.mrb[0].mxu0
    %232 = vdwg.mxu0
    %v233 = vld [vmem:[%s2] sm:$0x1]
    %v235 = vlaneseq
    %v236 = vshrl.u32 %v235, 7
    %v237 = vsub.s32 0, %v236
    %v238 = vrot.slane %v233, %v237
    %v240 = vmul.f32 %v155, %v238
    %v241 = vmul.f32 %v160, %v238
    %v242 = vmul.f32 %v165, %v238
    %v243 = vmul.f32 %v170, %v238
    %v244 = vmul.f32 %v175, %v238
    %v245 = vmul.f32 %v180, %v238
    %v246 = vmul.f32 %v185, %v238
    %v247 = vmul.f32 %v190, %v238
    %v248 = vmul.f32 %v195, %v238
    %v249 = vmul.f32 %v200, %v238
    %v250 = vmul.f32 %v205, %v238
    %v251 = vmul.f32 %v210, %v238
    %v252 = vmul.f32 %v215, %v238
    %v253 = vmul.f32 %v220, %v238
    %v254 = vmul.f32 %v225, %v238
    %v255 = vmul.f32 %v230, %v238
    %v256 = vld [vmem:[%s3] sm:$0x1]
    %v258 = vlaneseq
    %v259 = vshrl.u32 %v258, 7
    %v260 = vsub.s32 0, %v259
    %v261 = vrot.slane %v256, %v260
    %v263 = vadd.f32 %v240, %v261
    %v264 = vadd.f32 %v241, %v261
    %v265 = vadd.f32 %v242, %v261
    %v266 = vadd.f32 %v243, %v261
    %v267 = vadd.f32 %v244, %v261
    %v268 = vadd.f32 %v245, %v261
    %v269 = vadd.f32 %v246, %v261
    %v270 = vadd.f32 %v247, %v261
    %v271 = vadd.f32 %v248, %v261
    %v272 = vadd.f32 %v249, %v261
    %v273 = vadd.f32 %v250, %v261
    %v274 = vadd.f32 %v251, %v261
    %v275 = vadd.f32 %v252, %v261
    %v276 = vadd.f32 %v253, %v261
    %v277 = vadd.f32 %v254, %v261
    %v278 = vadd.f32 %v255, %v261
    %v279 = vld [vmem:[%s4] sm:$0xff]
    %v280 = vld [vmem:[%s4 + $0x8] sm:$0xff]
    %v281 = vld [vmem:[%s4 + $0x10] sm:$0xff]
    %v282 = vld [vmem:[%s4 + $0x18] sm:$0xff]
    %v283 = vld [vmem:[%s4 + $0x20] sm:$0xff]
    %v284 = vld [vmem:[%s4 + $0x28] sm:$0xff]
    %v285 = vld [vmem:[%s4 + $0x30] sm:$0xff]
    %v286 = vld [vmem:[%s4 + $0x38] sm:$0xff]
    %v287 = vld [vmem:[%s4 + $0x40] sm:$0xff]
    %v288 = vld [vmem:[%s4 + $0x48] sm:$0xff]
    %v289 = vld [vmem:[%s4 + $0x50] sm:$0xff]
    %v290 = vld [vmem:[%s4 + $0x58] sm:$0xff]
    %v291 = vld [vmem:[%s4 + $0x60] sm:$0xff]
    %v292 = vld [vmem:[%s4 + $0x68] sm:$0xff]
    %v293 = vld [vmem:[%s4 + $0x70] sm:$0xff]
    %v294 = vld [vmem:[%s4 + $0x78] sm:$0xff]
    %v295 = vadd.f32 %v263, %v279
    %v296 = vadd.f32 %v264, %v280
    %v297 = vadd.f32 %v265, %v281
    %v298 = vadd.f32 %v266, %v282
    %v299 = vadd.f32 %v267, %v283
    %v300 = vadd.f32 %v268, %v284
    %v301 = vadd.f32 %v269, %v285
    %v302 = vadd.f32 %v270, %v286
    %v303 = vadd.f32 %v271, %v287
    %v304 = vadd.f32 %v272, %v288
    %v305 = vadd.f32 %v273, %v289
    %v306 = vadd.f32 %v274, %v290
    %v307 = vadd.f32 %v275, %v291
    %v308 = vadd.f32 %v276, %v292
    %v309 = vadd.f32 %v277, %v293
    %v310 = vadd.f32 %v278, %v294
    %v311 = vmax.f32 %v295, 0.0
    %v312 = vmax.f32 %v296, 0.0
    %v313 = vmax.f32 %v297, 0.0
    %v314 = vmax.f32 %v298, 0.0
    %v315 = vmax.f32 %v299, 0.0
    %v316 = vmax.f32 %v300, 0.0
    %v317 = vmax.f32 %v301, 0.0
    %v318 = vmax.f32 %v302, 0.0
    %v319 = vmax.f32 %v303, 0.0
    %v320 = vmax.f32 %v304, 0.0
    %v321 = vmax.f32 %v305, 0.0
    %v322 = vmax.f32 %v306, 0.0
    %v323 = vmax.f32 %v307, 0.0
    %v324 = vmax.f32 %v308, 0.0
    %v325 = vmax.f32 %v309, 0.0
    %v326 = vmax.f32 %v310, 0.0
    %vm327 = vcmask 523264
    %328 = vst.msk [vmem:[#allocation2] sm:$0xff] %vm327, %v311
    %329 = vst.msk [vmem:[#allocation2 + $0x8] sm:$0xff] %vm327, %v312
    %330 = vst.msk [vmem:[#allocation2 + $0x10] sm:$0xff] %vm327, %v313
    %331 = vst.msk [vmem:[#allocation2 + $0x18] sm:$0xff] %vm327, %v314
    %332 = vst.msk [vmem:[#allocation2 + $0x20] sm:$0xff] %vm327, %v315
    %333 = vst.msk [vmem:[#allocation2 + $0x28] sm:$0xff] %vm327, %v316
    %334 = vst.msk [vmem:[#allocation2 + $0x30] sm:$0xff] %vm327, %v317
    %335 = vst.msk [vmem:[#allocation2 + $0x38] sm:$0xff] %vm327, %v318
    %336 = vst.msk [vmem:[#allocation2 + $0x40] sm:$0xff] %vm327, %v319
    %337 = vst.msk [vmem:[#allocation2 + $0x48] sm:$0xff] %vm327, %v320
    %338 = vst.msk [vmem:[#allocation2 + $0x50] sm:$0xff] %vm327, %v321
    %339 = vst.msk [vmem:[#allocation2 + $0x58] sm:$0xff] %vm327, %v322
    %340 = vst.msk [vmem:[#allocation2 + $0x60] sm:$0xff] %vm327, %v323
    %341 = vst.msk [vmem:[#allocation2 + $0x68] sm:$0xff] %vm327, %v324
    %342 = vst.msk [vmem:[#allocation2 + $0x70] sm:$0xff] %vm327, %v325
    %343 = vst.msk [vmem:[#allocation2 + $0x78] sm:$0xff] %vm327, %v326
    // Predicated region
    $region22: #{bottleneck_pallas.5} parent=1 // pred_check
      _
    $region23: #{bottleneck_pallas.5} parent=1 // pred_check_branch
      %345 = sbr.rel (0) target = $region25
    $region24: #{bottleneck_pallas.5} parent=1 // pred_region
      %s347 = ssub.s32 2048, 2048
      %348 = vsyncadd [#allocation3], %s347
      %s349 = sshll.u32 [#allocation2], 4
      %s350 = int_to_ptr.vmem [resolvable:$true] %s349
      %355 = dma.vmem_to_hbm [thread:$0]  %s350, 2048, %s5, [#allocation3], 128, 128, 8
    $region25: #{bottleneck_pallas.5} parent=1 // pred_fallthru
      _
    // Predicated region
    $region26: #{bottleneck_pallas.5} parent=1 // pred_check
      _
    $region27: #{bottleneck_pallas.5} parent=1 // pred_check_branch
      %357 = sbr.rel (0) target = $region29
    $region28: #{bottleneck_pallas.5} parent=1 // pred_region
      %358 = dma.done [#allocation3], 2048
    $region29: #{bottleneck_pallas.5} parent=1 // pred_fallthru
      _
    %359 = vsyncpa [#allocation3], 1

// kernel: bottleneck_pallas.4
$region0: #{bottleneck_pallas.4}
  #allocation0 [shape = 'u32[]', space=smem, size = 0x4, offset = 0x4, fixed_abs, tag = 'smem constant byte address 0x4 - core index']
  #allocation1 [shape = 'u32[144,128]{1,0:T(1,128)}', space=vmem, size = 0x12000, scoped, tag = 'internal scratch']
  %s0 = inlined_call_operand.vmem [shape: f32[2,10,10,16], index: 0, kind: input, shape index: {}, may-alias: {0,1,2}]
  %s1 = inlined_call_operand.vmem [shape: f32[2,10,10,16], index: 1, kind: input, shape index: {}, may-alias: {0,1,2}]
  %s2 = inlined_call_operand.vmem [shape: f32[2,10,10,16], index: 2, kind: input, shape index: {}, may-alias: {0,1,2}]
  %s3 = inlined_call_operand.vmem [shape: f32[9,16,16], index: 3, kind: input, shape index: {}]
  %s4 = inlined_call_operand.vmem [shape: f32[1,16], index: 4, kind: input, shape index: {}]
  %s5 = inlined_call_operand.vmem [shape: f32[1,16], index: 5, kind: input, shape index: {}]
  %s6 = inlined_call_operand.vmem [shape: f32[2,8,8,16], index: 6, kind: output, shape index: {}]
  %s7 = sld [smem:[#allocation0]]
  $region57: #{bottleneck_pallas.4} parent=0
    _
  %s9 = ssub.s32 1, %s7
  %s10 = scalar_select 0, %s9, %s7
  loop: start=0, step=1, limit=18
  $region2: #{bottleneck_pallas.4} parent=0 // loop_pre_header
    _
  $region3: #{bottleneck_pallas.4} parent=0 // loop_header
    %s12 = sphi 0, %s16
    %p13 = scmp.ge.s32.totalorder %s12, 18
    %s19 = sphi 0, %s31
    %s20 = sphi 0, %s27
    %s21 = sphi 0, %s19
    %s22 = sphi 0, %s20
    %s23 = sphi 0, %s21
    %s24 = sphi 0, %s22
    %s36 = sphi 0, %s38
    %s39 = sphi 0, %s36
    %s40 = sphi 0, %s39
    %s56 = sphi 0, %s40
    %s66 = sphi 0, %s68
    %s69 = sphi 0, %s66
    %s70 = sphi 0, %s69
    %s86 = sphi 0, %s70
    %s96 = sphi 0, %s98
    %s99 = sphi 0, %s96
    %s100 = sphi 0, %s99
    %s116 = sphi 0, %s100
    %s120 = sphi 0, %s120
    %s122 = sphi 0, %s120
    %s123 = sphi 0, %s122
    %s137 = sphi 0, %s123
    %s141 = sphi 0, %s141
    %s143 = sphi 0, %s141
    %s144 = sphi 0, %s143
    %s158 = sphi 0, %s144
    %s162 = sphi 0, %s162
    %s164 = sphi 0, %s162
    %s165 = sphi 0, %s164
    %s179 = sphi 0, %s165
    %s187 = sphi 0, %s189
    %s190 = sphi 0, %s187
    %s191 = sphi 0, %s190
    %s207 = sphi 0, %s191
  $region4: #{bottleneck_pallas.4} parent=0 // loop_header_branch
    %15 = sbr.rel (%p13) target = $region8
  $region5: #{bottleneck_pallas.4} parent=0 // loop_body
    %s17 = ssub.s32 %s12, 1
    %s18 = ssub.s32 %s12, 2
    %s25 = sadd.s32 1, %s20
    %p26 = scmp.ge.s32.totalorder %s25, 8
    %s27 = scalar_select %p26, 0, %s25
    %s28 = sadd.s32 1, %s19
    %s29 = scalar_select %p26, %s28, %s19
    %p30 = scmp.ge.s32.totalorder %s29, 2
    %s31 = scalar_select %p30, 0, %s29
    %s32 = ssub.s32 %s19, %s31
    %s33 = ssub.s32 %s20, %s27
    %s34 = sor.u32 %s32, %s33
    %p35 = scmp.eq.s32.totalorder %s34, 0
    %s37 = sadd.s32 %s36, 1
    %s38 = scalar_select %p35, %s36, %s37
    %p41 = pneg %p35
    %p42 = scmp.eq.s32.totalorder %s12, 15
    %p43 = por %p41, %p42
    %p44 = scmp.ne.s32.totalorder %s36, %s39
    %p45 = scmp.eq.s32.totalorder %s12, 0
    %p46 = por %p44, %p45
    %p47 = scmp.ne.s32.totalorder %s36, %s39
    %p48 = scmp.eq.s32.totalorder %s17, 15
    %p49 = por %p47, %p48
    %p50 = scmp.ne.s32.totalorder %s39, %s40
    %p51 = scmp.eq.s32.totalorder %s17, 0
    %p52 = por %p50, %p51
    %p53 = scmp.ne.s32.totalorder %s39, %s40
    %p54 = scmp.eq.s32.totalorder %s18, 15
    %p55 = por %p53, %p54
    %p57 = scmp.ne.s32.totalorder %s40, %s56
    %p58 = scmp.eq.s32.totalorder %s18, 0
    %p59 = por %p57, %p58
    %s60 = sadd.s32 %s20, 1
    %s61 = sadd.s32 %s27, 1
    %s62 = ssub.s32 %s19, %s31
    %s63 = ssub.s32 %s60, %s61
    %s64 = sor.u32 %s62, %s63
    %p65 = scmp.eq.s32.totalorder %s64, 0
    %s67 = sadd.s32 %s66, 1
    %s68 = scalar_select %p65, %s66, %s67
    %p71 = pneg %p65
    %p72 = scmp.eq.s32.totalorder %s12, 15
    %p73 = por %p71, %p72
    %p74 = scmp.ne.s32.totalorder %s66, %s69
    %p75 = scmp.eq.s32.totalorder %s12, 0
    %p76 = por %p74, %p75
    %p77 = scmp.ne.s32.totalorder %s66, %s69
    %p78 = scmp.eq.s32.totalorder %s17, 15
    %p79 = por %p77, %p78
    %p80 = scmp.ne.s32.totalorder %s69, %s70
    %p81 = scmp.eq.s32.totalorder %s17, 0
    %p82 = por %p80, %p81
    %p83 = scmp.ne.s32.totalorder %s69, %s70
    %p84 = scmp.eq.s32.totalorder %s18, 15
    %p85 = por %p83, %p84
    %p87 = scmp.ne.s32.totalorder %s70, %s86
    %p88 = scmp.eq.s32.totalorder %s18, 0
    %p89 = por %p87, %p88
    %s90 = sadd.s32 %s20, 2
    %s91 = sadd.s32 %s27, 2
    %s92 = ssub.s32 %s19, %s31
    %s93 = ssub.s32 %s90, %s91
    %s94 = sor.u32 %s92, %s93
    %p95 = scmp.eq.s32.totalorder %s94, 0
    %s97 = sadd.s32 %s96, 1
    %s98 = scalar_select %p95, %s96, %s97
    %p101 = pneg %p95
    %p102 = scmp.eq.s32.totalorder %s12, 15
    %p103 = por %p101, %p102
    %p104 = scmp.ne.s32.totalorder %s96, %s99
    %p105 = scmp.eq.s32.totalorder %s12, 0
    %p106 = por %p104, %p105
    %p107 = scmp.ne.s32.totalorder %s96, %s99
    %p108 = scmp.eq.s32.totalorder %s17, 15
    %p109 = por %p107, %p108
    %p110 = scmp.ne.s32.totalorder %s99, %s100
    %p111 = scmp.eq.s32.totalorder %s17, 0
    %p112 = por %p110, %p111
    %p113 = scmp.ne.s32.totalorder %s99, %s100
    %p114 = scmp.eq.s32.totalorder %s18, 15
    %p115 = por %p113, %p114
    %p117 = scmp.ne.s32.totalorder %s100, %s116
    %p118 = scmp.eq.s32.totalorder %s18, 0
    %p119 = por %p117, %p118
    %s121 = sadd.s32 %s120, 1
    %p124 = scmp.eq.s32.totalorder %s12, 15
    %p125 = scmp.ne.s32.totalorder %s120, %s122
    %p126 = scmp.eq.s32.totalorder %s12, 0
    %p127 = por %p125, %p126
    %p128 = scmp.ne.s32.totalorder %s120, %s122
    %p129 = scmp.eq.s32.totalorder %s17, 15
    %p130 = por %p128, %p129
    %p131 = scmp.ne.s32.totalorder %s122, %s123
    %p132 = scmp.eq.s32.totalorder %s17, 0
    %p133 = por %p131, %p132
    %p134 = scmp.ne.s32.totalorder %s122, %s123
    %p135 = scmp.eq.s32.totalorder %s18, 15
    %p136 = por %p134, %p135
    %p138 = scmp.ne.s32.totalorder %s123, %s137
    %p139 = scmp.eq.s32.totalorder %s18, 0
    %p140 = por %p138, %p139
    %s142 = sadd.s32 %s141, 1
    %p145 = scmp.eq.s32.totalorder %s12, 15
    %p146 = scmp.ne.s32.totalorder %s141, %s143
    %p147 = scmp.eq.s32.totalorder %s12, 0
    %p148 = por %p146, %p147
    %p149 = scmp.ne.s32.totalorder %s141, %s143
    %p150 = scmp.eq.s32.totalorder %s17, 15
    %p151 = por %p149, %p150
    %p152 = scmp.ne.s32.totalorder %s143, %s144
    %p153 = scmp.eq.s32.totalorder %s17, 0
    %p154 = por %p152, %p153
    %p155 = scmp.ne.s32.totalorder %s143, %s144
    %p156 = scmp.eq.s32.totalorder %s18, 15
    %p157 = por %p155, %p156
    %p159 = scmp.ne.s32.totalorder %s144, %s158
    %p160 = scmp.eq.s32.totalorder %s18, 0
    %p161 = por %p159, %p160
    %s163 = sadd.s32 %s162, 1
    %p166 = scmp.eq.s32.totalorder %s12, 15
    %p167 = scmp.ne.s32.totalorder %s162, %s164
    %p168 = scmp.eq.s32.totalorder %s12, 0
    %p169 = por %p167, %p168
    %p170 = scmp.ne.s32.totalorder %s162, %s164
    %p171 = scmp.eq.s32.totalorder %s17, 15
    %p172 = por %p170, %p171
    %p173 = scmp.ne.s32.totalorder %s164, %s165
    %p174 = scmp.eq.s32.totalorder %s17, 0
    %p175 = por %p173, %p174
    %p176 = scmp.ne.s32.totalorder %s164, %s165
    %p177 = scmp.eq.s32.totalorder %s18, 15
    %p178 = por %p176, %p177
    %p180 = scmp.ne.s32.totalorder %s165, %s179
    %p181 = scmp.eq.s32.totalorder %s18, 0
    %p182 = por %p180, %p181
    %s183 = ssub.s32 %s19, %s31
    %s184 = ssub.s32 %s20, %s27
    %s185 = sor.u32 %s183, %s184
    %p186 = scmp.eq.s32.totalorder %s185, 0
    %s188 = sadd.s32 %s187, 1
    %s189 = scalar_select %p186, %s187, %s188
    %p192 = pneg %p186
    %p193 = scmp.eq.s32.totalorder %s12, 15
    %p194 = por %p192, %p193
    %p195 = scmp.ne.s32.totalorder %s187, %s190
    %p196 = scmp.eq.s32.totalorder %s12, 0
    %p197 = por %p195, %p196
    %p198 = scmp.ne.s32.totalorder %s187, %s190
    %p199 = scmp.eq.s32.totalorder %s17, 15
    %p200 = por %p198, %p199
    %p201 = scmp.ne.s32.totalorder %s190, %s191
    %p202 = scmp.eq.s32.totalorder %s17, 0
    %p203 = por %p201, %p202
    %p204 = scmp.ne.s32.totalorder %s190, %s191
    %p205 = scmp.eq.s32.totalorder %s18, 15
    %p206 = por %p204, %p205
    %p208 = scmp.ne.s32.totalorder %s191, %s207
    %p209 = scmp.eq.s32.totalorder %s18, 0
    %p210 = por %p208, %p209
    %p211 = scmp.le.s32.totalorder 1, %s12
    %p212 = scmp.lt.s32.totalorder %s12, 17
    %p213 = pnand %p211, %p212
    %p214 = pneg %p213
    // Predicated region
    $region9: #{bottleneck_pallas.4} parent=5 // pred_check
      _
    $region10: #{bottleneck_pallas.4} parent=5 // pred_check_branch
      %216 = sbr.rel (%p213) target = $region12
    $region11: #{bottleneck_pallas.4} parent=5 // pred_region
      %s217 = ssub.s32 %s12, 1
      // Predicated region
      $region13: #{bottleneck_pallas.4} parent=11 // pred_check
        %p218 = pneg %p133
      $region14: #{bottleneck_pallas.4} parent=11 // pred_check_branch
        %220 = sbr.rel (%p218) target = $region16
      $region15: #{bottleneck_pallas.4} parent=11 // pred_region
        _
      $region16: #{bottleneck_pallas.4} parent=11 // pred_fallthru
        _
      // Predicated region
      $region17: #{bottleneck_pallas.4} parent=11 // pred_check
        %p221 = pneg %p154
      $region18: #{bottleneck_pallas.4} parent=11 // pred_check_branch
        %223 = sbr.rel (%p221) target = $region20
      $region19: #{bottleneck_pallas.4} parent=11 // pred_region
        _
      $region20: #{bottleneck_pallas.4} parent=11 // pred_fallthru
        _
      // Predicated region
      $region21: #{bottleneck_pallas.4} parent=11 // pred_check
        %p224 = pneg %p175
      $region22: #{bottleneck_pallas.4} parent=11 // pred_check_branch
        %226 = sbr.rel (%p224) target = $region24
      $region23: #{bottleneck_pallas.4} parent=11 // pred_region
        _
      $region24: #{bottleneck_pallas.4} parent=11 // pred_fallthru
        _
    $region12: #{bottleneck_pallas.4} parent=5 // pred_fallthru
      _
    %p227 = scmp.lt.s32.totalorder %s12, 16
    // Predicated region
    $region25: #{bottleneck_pallas.4} parent=5 // pred_check
      %p228 = pneg %p227
    $region26: #{bottleneck_pallas.4} parent=5 // pred_check_branch
      %230 = sbr.rel (%p228) target = $region28
    $region27: #{bottleneck_pallas.4} parent=5 // pred_region
      // Predicated region
      $region29: #{bottleneck_pallas.4} parent=27 // pred_check
        %p231 = pneg %p46
      $region30: #{bottleneck_pallas.4} parent=27 // pred_check_branch
        %233 = sbr.rel (%p231) target = $region32
      $region31: #{bottleneck_pallas.4} parent=27 // pred_region
        %p234 = scmp.lt.s32.totalorder %s19, 1
        %s235 = scalar_select %p234, %s19, 1
        %p236 = scmp.lt.s32.totalorder %s20, 9
        %s237 = scalar_select %p236, %s20, 9
        %s238 = smul.addr %s237, 2
        %s239 = smul.addr %s235, 20
        %s240 = sadd.s32 %s238, %s239
        %s241 = smul.addr %s240, 8
        %s242 = scalar_lea.vmem %s0, %s241
      $region32: #{bottleneck_pallas.4} parent=27 // pred_fallthru
        _
      // Predicated region
      $region33: #{bottleneck_pallas.4} parent=27 // pred_check
        %p243 = pneg %p76
      $region34: #{bottleneck_pallas.4} parent=27 // pred_check_branch
        %245 = sbr.rel (%p243) target = $region36
      $region35: #{bottleneck_pallas.4} parent=27 // pred_region
        %s246 = sadd.s32 %s20, 1
        %p247 = scmp.lt.s32.totalorder %s19, 1
        %s248 = scalar_select %p247, %s19, 1
        %p249 = scmp.lt.s32.totalorder %s246, 9
        %s250 = scalar_select %p249, %s246, 9
        %s251 = smul.addr %s250, 2
        %s252 = smul.addr %s248, 20
        %s253 = sadd.s32 %s251, %s252
        %s254 = smul.addr %s253, 8
        %s255 = scalar_lea.vmem %s1, %s254
        %s256 = sadd.s32 %s20, 1
      $region36: #{bottleneck_pallas.4} parent=27 // pred_fallthru
        _
      // Predicated region
      $region37: #{bottleneck_pallas.4} parent=27 // pred_check
        %p257 = pneg %p106
      $region38: #{bottleneck_pallas.4} parent=27 // pred_check_branch
        %259 = sbr.rel (%p257) target = $region40
      $region39: #{bottleneck_pallas.4} parent=27 // pred_region
        %s260 = sadd.s32 %s20, 2
        %p261 = scmp.lt.s32.totalorder %s19, 1
        %s262 = scalar_select %p261, %s19, 1
        %p263 = scmp.lt.s32.totalorder %s260, 9
        %s264 = scalar_select %p263, %s260, 9
        %s265 = smul.addr %s264, 2
        %s266 = smul.addr %s262, 20
        %s267 = sadd.s32 %s265, %s266
        %s268 = smul.addr %s267, 8
        %s269 = scalar_lea.vmem %s2, %s268
        %s270 = sadd.s32 %s20, 2
      $region40: #{bottleneck_pallas.4} parent=27 // pred_fallthru
        _
    $region28: #{bottleneck_pallas.4} parent=5 // pred_fallthru
      _
    %p271 = scmp.le.s32.totalorder 1, %s12
    %p272 = scmp.lt.s32.totalorder %s12, 17
    %p273 = pnand %p271, %p272
    %p274 = pneg %p273
    // Predicated region
    $region41: #{bottleneck_pallas.4} parent=5 // pred_check
      _
    $region42: #{bottleneck_pallas.4} parent=5 // pred_check_branch
      %276 = sbr.rel (%p273) target = $region44
    $region43: #{bottleneck_pallas.4} parent=5 // pred_region
      %s277 = ssub.s32 %s12, 1
      %p278 = scmp.lt.s32.totalorder %s21, 1
      %s279 = scalar_select %p278, %s21, 1
      %p280 = scmp.lt.s32.totalorder %s22, 9
      %s281 = scalar_select %p280, %s22, 9
      %s282 = smul.addr %s281, 2
      %s283 = smul.addr %s279, 20
      %s284 = sadd.s32 %s282, %s283
      %s285 = smul.addr %s284, 8
      %s286 = scalar_lea.vmem %s0, %s285
      %p287 = pneg %p52
      %p288 = pneg %p49
      %s289 = sadd.s32 %s22, 1
      %p290 = scmp.lt.s32.totalorder %s21, 1
      %s291 = scalar_select %p290, %s21, 1
      %p292 = scmp.lt.s32.totalorder %s289, 9
      %s293 = scalar_select %p292, %s289, 9
      %s294 = smul.addr %s293, 2
      %s295 = smul.addr %s291, 20
      %s296 = sadd.s32 %s294, %s295
      %s297 = smul.addr %s296, 8
      %s298 = scalar_lea.vmem %s1, %s297
      %p299 = pneg %p82
      %p300 = pneg %p79
      %s301 = sadd.s32 %s22, 2
      %p302 = scmp.lt.s32.totalorder %s21, 1
      %s303 = scalar_select %p302, %s21, 1
      %p304 = scmp.lt.s32.totalorder %s301, 9
      %s305 = scalar_select %p304, %s301, 9
      %s306 = smul.addr %s305, 2
      %s307 = smul.addr %s303, 20
      %s308 = sadd.s32 %s306, %s307
      %s309 = smul.addr %s308, 8
      %s310 = scalar_lea.vmem %s2, %s309
      %p311 = pneg %p112
      %p312 = pneg %p109
      %p313 = pneg %p133
      %p314 = pneg %p130
      %p315 = pneg %p154
      %p316 = pneg %p151
      %p317 = pneg %p175
      %p318 = pneg %p172
      %p319 = pneg %p203
      %p320 = pneg %p200
      %p321 = scmp.lt.s32.totalorder %s21, 1
      %s322 = scalar_select %p321, %s21, 1
      %p323 = scmp.lt.s32.totalorder %s22, 7
      %s324 = scalar_select %p323, %s22, 7
      %s325 = smul.addr %s322, 8
      %s326 = sadd.s32 %s324, %s325
      %s327 = smul.addr %s326, 8
      %s328 = scalar_lea.vmem %s6, %s327
      %p329 = scmp.lt.s32.totalorder %s21, 1
      %s330 = scalar_select %p329, %s21, 1
      %p331 = scmp.lt.s32.totalorder %s22, 9
      %s332 = scalar_select %p331, %s22, 9
      %s333 = smul.addr %s332, 2
      %s334 = smul.addr %s330, 20
      %s335 = sadd.s32 %s333, %s334
      %s336 = smul.addr %s335, 8
      %s337 = scalar_lea.vmem %s0, %s336
      %s338 = sadd.s32 %s22, 1
      %p339 = scmp.lt.s32.totalorder %s21, 1
      %s340 = scalar_select %p339, %s21, 1
      %p341 = scmp.lt.s32.totalorder %s338, 9
      %s342 = scalar_select %p341, %s338, 9
      %s343 = smul.addr %s342, 2
      %s344 = smul.addr %s340, 20
      %s345 = sadd.s32 %s343, %s344
      %s346 = smul.addr %s345, 8
      %s347 = scalar_lea.vmem %s1, %s346
      %s348 = sadd.s32 %s22, 1
      %s349 = sadd.s32 %s22, 2
      %p350 = scmp.lt.s32.totalorder %s21, 1
      %s351 = scalar_select %p350, %s21, 1
      %p352 = scmp.lt.s32.totalorder %s349, 9
      %s353 = scalar_select %p352, %s349, 9
      %s354 = smul.addr %s353, 2
      %s355 = smul.addr %s351, 20
      %s356 = sadd.s32 %s354, %s355
      %s357 = smul.addr %s356, 8
      %s358 = scalar_lea.vmem %s2, %s357
      %s359 = sadd.s32 %s22, 2
      %p360 = scmp.lt.s32.totalorder %s21, 1
      %s361 = scalar_select %p360, %s21, 1
      %p362 = scmp.lt.s32.totalorder %s22, 7
      %s363 = scalar_select %p362, %s22, 7
      %s364 = smul.addr %s361, 8
      %s365 = sadd.s32 %s363, %s364
      %s366 = smul.addr %s365, 8
      %s367 = scalar_lea.vmem %s6, %s366
      %v368 = vld [vmem:[%s337] sm:$0xff]
      %v369 = vld [vmem:[%s337 + $0x8] sm:$0x3]
      %v370 = vld [vmem:[%s347] sm:$0xff]
      %v371 = vld [vmem:[%s347 + $0x8] sm:$0x3]
      %v372 = vld [vmem:[%s358] sm:$0xff]
      %v373 = vld [vmem:[%s358 + $0x8] sm:$0x3]
      %v374 = vld [vmem:[%s3] sm:$0xff]
      %v375 = vld [vmem:[%s3 + $0x8] sm:$0xff]
      %s376 = scalar_lea.vmem %s3, 16
      %v377 = vld [vmem:[%s376] sm:$0xff]
      %v378 = vld [vmem:[%s376 + $0x8] sm:$0xff]
      %vm381 = vcmask 1046528
      %v382 = vrot.slane %v368, 1
      %v383 = vrot.slane %v369, 1
      %v384 = vsel %vm381, %v382, %v383
      %vm385 = vcmask 130048
      %v386 = vsel %vm385, %v384, 0
      %388 = vmatprep.subr.mxu0 0.0
      %389 = vmatpush1.msra.mxu0 %v377
      %390 = vmatprep.subr.mxu0 0.0
      %391 = vmatpush1.msra.mxu0 %v378
      %392 = vmatprep.subr.mxu0 0.0
      %393 = vmatpush1.msra.mxu0 0.0
      %394 = vmatprep.subr.mxu0 0.0
      %395 = vmatpush1.msra.mxu0 0.0
      %396 = vmatprep.subr.mxu0 0.0
      %397 = vmatpush1.msra.mxu0 0.0
      %398 = vmatprep.subr.mxu0 0.0
      %399 = vmatpush1.msra.mxu0 0.0
      %400 = vmatprep.subr.mxu0 0.0
      %401 = vmatpush1.msra.mxu0 0.0
      %402 = vmatprep.subr.mxu0 0.0
      %403 = vmatpush1.msra.mxu0 0.0
      %404 = vmatprep.subr.mxu0 0.0
      %405 = vmatpush1.msra.mxu0 0.0
      %406 = vmatprep.subr.mxu0 0.0
      %407 = vmatpush1.msra.mxu0 0.0
      %408 = vmatprep.subr.mxu0 0.0
      %409 = vmatpush1.msra.mxu0 0.0
      %410 = vmatprep.subr.mxu0 0.0
      %411 = vmatpush1.msra.mxu0 0.0
      %412 = vmatprep.subr.mxu0 0.0
      %413 = vmatpush1.msra.mxu0 0.0
      %414 = vmatprep.subr.mxu0 0.0
      %415 = vmatpush1.msra.mxu0 0.0
      %416 = vmatprep.subr.mxu0 0.0
      %417 = vmatpush1.msra.mxu0 0.0
      %418 = vmatprep.subr.mxu0 0.0
      %419 = vmatpush1.msra.mxu0 0.0
      %420 = vmatprep.subr.mxu0 0.0
      %421 = vmatpush1.msra.mxu0 0.0
      %422 = vmatprep.subr.mxu0 0.0
      %423 = vmatpush1.msra.mxu0 0.0
      %424 = vmatprep.subr.mxu0 0.0
      %425 = vmatpush1.msra.mxu0 0.0
      %426 = vmatprep.subr.mxu0 0.0
      %427 = vmatpush1.msra.mxu0 0.0
      %428 = vmatprep.subr.mxu0 0.0
      %429 = vmatpush1.msra.mxu0 0.0
      %430 = vmatprep.subr.mxu0 0.0
      %431 = vmatpush1.msra.mxu0 0.0
      %432 = vmatprep.subr.mxu0 0.0
      %433 = vmatpush1.msra.mxu0 0.0
      %434 = vmatprep.subr.mxu0 0.0
      %435 = vmatpush1.msra.mxu0 0.0
      %436 = vmatprep.subr.mxu0 0.0
      %437 = vmatpush1.msra.mxu0 0.0
      %438 = vmatprep.subr.mxu0 0.0
      %439 = vmatpush1.msra.mxu0 0.0
      %440 = vmatprep.subr.mxu0 0.0
      %441 = vmatpush1.msra.mxu0 0.0
      %442 = vmatprep.subr.mxu0 0.0
      %443 = vmatpush1.msra.mxu0 0.0
      %444 = vmatprep.subr.mxu0 0.0
      %445 = vmatpush1.msra.mxu0 0.0
      %446 = vmatprep.subr.mxu0 0.0
      %447 = vmatpush1.msra.mxu0 0.0
      %448 = vmatprep.subr.mxu0 0.0
      %449 = vmatpush1.msra.mxu0 0.0
      %450 = vmatprep.subr.mxu0 0.0
      %451 = vmatpush1.msra.mxu0 0.0
      %452 = vmatprep.mubr.f32.mxu0 0.0
      %453 = vmatmul.mubr.f32.gmra.mrb[0].mxu0 %v386
      %v454 = vpop.f32.mrb[0].mxu0
      %v455 = vadd.f32 0.0, %v454
      %v456 = vpop.f32.mrb[0].mxu0
      %457 = vdwg.mxu0
      %v458 = vsel %vm385, %v368, 0
      %460 = vmatprep.subr.mxu0 0.0
      %461 = vmatpush1.msra.mxu0 %v374
      %462 = vmatprep.subr.mxu0 0.0
      %463 = vmatpush1.msra.mxu0 %v375
      %464 = vmatprep.subr.mxu0 0.0
      %465 = vmatpush1.msra.mxu0 0.0
      %466 = vmatprep.subr.mxu0 0.0
      %467 = vmatpush1.msra.mxu0 0.0
      %468 = vmatprep.subr.mxu0 0.0
      %469 = vmatpush1.msra.mxu0 0.0
      %470 = vmatprep.subr.mxu0 0.0
      %471 = vmatpush1.msra.mxu0 0.0
      %472 = vmatprep.subr.mxu0 0.0
      %473 = vmatpush1.msra.mxu0 0.0
      %474 = vmatprep.subr.mxu0 0.0
      %475 = vmatpush1.msra.mxu0 0.0
      %476 = vmatprep.subr.mxu0 0.0
      %477 = vmatpush1.msra.mxu0 0.0
      %478 = vmatprep.subr.mxu0 0.0
      %479 = vmatpush1.msra.mxu0 0.0
      %480 = vmatprep.subr.mxu0 0.0
      %481 = vmatpush1.msra.mxu0 0.0
      %482 = vmatprep.subr.mxu0 0.0
      %483 = vmatpush1.msra.mxu0 0.0
      %484 = vmatprep.subr.mxu0 0.0
      %485 = vmatpush1.msra.mxu0 0.0
      %486 = vmatprep.subr.mxu0 0.0
      %487 = vmatpush1.msra.mxu0 0.0
      %488 = vmatprep.subr.mxu0 0.0
      %489 = vmatpush1.msra.mxu0 0.0
      %490 = vmatprep.subr.mxu0 0.0
      %491 = vmatpush1.msra.mxu0 0.0
      %492 = vmatprep.subr.mxu0 0.0
      %493 = vmatpush1.msra.mxu0 0.0
      %494 = vmatprep.subr.mxu0 0.0
      %495 = vmatpush1.msra.mxu0 0.0
      %496 = vmatprep.subr.mxu0 0.0
      %497 = vmatpush1.msra.mxu0 0.0
      %498 = vmatprep.subr.mxu0 0.0
      %499 = vmatpush1.msra.mxu0 0.0
      %500 = vmatprep.subr.mxu0 0.0
      %501 = vmatpush1.msra.mxu0 0.0
      %502 = vmatprep.subr.mxu0 0.0
      %503 = vmatpush1.msra.mxu0 0.0
      %504 = vmatprep.subr.mxu0 0.0
      %505 = vmatpush1.msra.mxu0 0.0
      %506 = vmatprep.subr.mxu0 0.0
      %507 = vmatpush1.msra.mxu0 0.0
      %508 = vmatprep.subr.mxu0 0.0
      %509 = vmatpush1.msra.mxu0 0.0
      %510 = vmatprep.subr.mxu0 0.0
      %511 = vmatpush1.msra.mxu0 0.0
      %512 = vmatprep.subr.mxu0 0.0
      %513 = vmatpush1.msra.mxu0 0.0
      %514 = vmatprep.subr.mxu0 0.0
      %515 = vmatpush1.msra.mxu0 0.0
      %516 = vmatprep.subr.mxu0 0.0
      %517 = vmatpush1.msra.mxu0 0.0
      %518 = vmatprep.subr.mxu0 0.0
      %519 = vmatpush1.msra.mxu0 0.0
      %520 = vmatprep.subr.mxu0 0.0
      %521 = vmatpush1.msra.mxu0 0.0
      %522 = vmatprep.subr.mxu0 0.0
      %523 = vmatpush1.msra.mxu0 0.0
      %524 = vmatprep.mubr.f32.mxu0 0.0
      %525 = vmatmul.mubr.f32.gmra.mrb[0].mxu0 %v458
      %v526 = vpop.f32.mrb[0].mxu0
      %v527 = vadd.f32 %v455, %v526
      %v528 = vpop.f32.mrb[0].mxu0
      %529 = vdwg.mxu0
      %s530 = scalar_lea.vmem %s3, 32
      %v531 = vld [vmem:[%s530] sm:$0xff]
      %v532 = vld [vmem:[%s530 + $0x8] sm:$0xff]
      %vm533 = vcmask 1045504
      %v534 = vrot.slane %v368, 2
      %v535 = vrot.slane %v369, 2
      %v536 = vsel %vm533, %v534, %v535
      %v537 = vsel %vm385, %v536, 0
      %539 = vmatprep.subr.mxu0 0.0
      %540 = vmatpush1.msra.mxu0 %v531
      %541 = vmatprep.subr.mxu0 0.0
      %542 = vmatpush1.msra.mxu0 %v532
      %543 = vmatprep.subr.mxu0 0.0
      %544 = vmatpush1.msra.mxu0 0.0
      %545 = vmatprep.subr.mxu0 0.0
      %546 = vmatpush1.msra.mxu0 0.0
      %547 = vmatprep.subr.mxu0 0.0
      %548 = vmatpush1.msra.mxu0 0.0
      %549 = vmatprep.subr.mxu0 0.0
      %550 = vmatpush1.msra.mxu0 0.0
      %551 = vmatprep.subr.mxu0 0.0
      %552 = vmatpush1.msra.mxu0 0.0
      %553 = vmatprep.subr.mxu0 0.0
      %554 = vmatpush1.msra.mxu0 0.0
      %555 = vmatprep.subr.mxu0 0.0
      %556 = vmatpush1.msra.mxu0 0.0
      %557 = vmatprep.subr.mxu0 0.0
      %558 = vmatpush1.msra.mxu0 0.0
      %559 = vmatprep.subr.mxu0 0.0
      %560 = vmatpush1.msra.mxu0 0.0
      %561 = vmatprep.subr.mxu0 0.0
      %562 = vmatpush1.msra.mxu0 0.0
      %563 = vmatprep.subr.mxu0 0.0
      %564 = vmatpush1.msra.mxu0 0.0
      %565 = vmatprep.subr.mxu0 0.0
      %566 = vmatpush1.msra.mxu0 0.0
      %567 = vmatprep.subr.mxu0 0.0
      %568 = vmatpush1.msra.mxu0 0.0
      %569 = vmatprep.subr.mxu0 0.0
      %570 = vmatpush1.msra.mxu0 0.0
      %571 = vmatprep.subr.mxu0 0.0
      %572 = vmatpush1.msra.mxu0 0.0
      %573 = vmatprep.subr.mxu0 0.0
      %574 = vmatpush1.msra.mxu0 0.0
      %575 = vmatprep.subr.mxu0 0.0
      %576 = vmatpush1.msra.mxu0 0.0
      %577 = vmatprep.subr.mxu0 0.0
      %578 = vmatpush1.msra.mxu0 0.0
      %579 = vmatprep.subr.mxu0 0.0
      %580 = vmatpush1.msra.mxu0 0.0
      %581 = vmatprep.subr.mxu0 0.0
      %582 = vmatpush1.msra.mxu0 0.0
      %583 = vmatprep.subr.mxu0 0.0
      %584 = vmatpush1.msra.mxu0 0.0
      %585 = vmatprep.subr.mxu0 0.0
      %586 = vmatpush1.msra.mxu0 0.0
      %587 = vmatprep.subr.mxu0 0.0
      %588 = vmatpush1.msra.mxu0 0.0
      %589 = vmatprep.subr.mxu0 0.0
      %590 = vmatpush1.msra.mxu0 0.0
      %591 = vmatprep.subr.mxu0 0.0
      %592 = vmatpush1.msra.mxu0 0.0
      %593 = vmatprep.subr.mxu0 0.0
      %594 = vmatpush1.msra.mxu0 0.0
      %595 = vmatprep.subr.mxu0 0.0
      %596 = vmatpush1.msra.mxu0 0.0
      %597 = vmatprep.subr.mxu0 0.0
      %598 = vmatpush1.msra.mxu0 0.0
      %599 = vmatprep.subr.mxu0 0.0
      %600 = vmatpush1.msra.mxu0 0.0
      %601 = vmatprep.subr.mxu0 0.0
      %602 = vmatpush1.msra.mxu0 0.0
      %603 = vmatprep.mubr.f32.mxu0 0.0
      %604 = vmatmul.mubr.f32.gmra.mrb[0].mxu0 %v537
      %v605 = vpop.f32.mrb[0].mxu0
      %v606 = vadd.f32 0.0, %v605
      %v607 = vpop.f32.mrb[0].mxu0
      %608 = vdwg.mxu0
      %v609 = vadd.f32 %v527, %v606
      %s610 = scalar_lea.vmem %s3, 48
      %v611 = vld [vmem:[%s610] sm:$0xff]
      %v612 = vld [vmem:[%s610 + $0x8] sm:$0xff]
      %v614 = vsel %vm385, %v370, 0
      %616 = vmatprep.subr.mxu0 0.0
      %617 = vmatpush1.msra.mxu0 %v611
      %618 = vmatprep.subr.mxu0 0.0
      %619 = vmatpush1.msra.mxu0 %v612
      %620 = vmatprep.subr.mxu0 0.0
      %621 = vmatpush1.msra.mxu0 0.0
      %622 = vmatprep.subr.mxu0 0.0
      %623 = vmatpush1.msra.mxu0 0.0
      %624 = vmatprep.subr.mxu0 0.0
      %625 = vmatpush1.msra.mxu0 0.0
      %626 = vmatprep.subr.mxu0 0.0
      %627 = vmatpush1.msra.mxu0 0.0
      %628 = vmatprep.subr.mxu0 0.0
      %629 = vmatpush1.msra.mxu0 0.0
      %630 = vmatprep.subr.mxu0 0.0
      %631 = vmatpush1.msra.mxu0 0.0
      %632 = vmatprep.subr.mxu0 0.0
      %633 = vmatpush1.msra.mxu0 0.0
      %634 = vmatprep.subr.mxu0 0.0
      %635 = vmatpush1.msra.mxu0 0.0
      %636 = vmatprep.subr.mxu0 0.0
      %637 = vmatpush1.msra.mxu0 0.0
      %638 = vmatprep.subr.mxu0 0.0
      %639 = vmatpush1.msra.mxu0 0.0
      %640 = vmatprep.subr.mxu0 0.0
      %641 = vmatpush1.msra.mxu0 0.0
      %642 = vmatprep.subr.mxu0 0.0
      %643 = vmatpush1.msra.mxu0 0.0
      %644 = vmatprep.subr.mxu0 0.0
      %645 = vmatpush1.msra.mxu0 0.0
      %646 = vmatprep.subr.mxu0 0.0
      %647 = vmatpush1.msra.mxu0 0.0
      %648 = vmatprep.subr.mxu0 0.0
      %649 = vmatpush1.msra.mxu0 0.0
      %650 = vmatprep.subr.mxu0 0.0
      %651 = vmatpush1.msra.mxu0 0.0
      %652 = vmatprep.subr.mxu0 0.0
      %653 = vmatpush1.msra.mxu0 0.0
      %654 = vmatprep.subr.mxu0 0.0
      %655 = vmatpush1.msra.mxu0 0.0
      %656 = vmatprep.subr.mxu0 0.0
      %657 = vmatpush1.msra.mxu0 0.0
      %658 = vmatprep.subr.mxu0 0.0
      %659 = vmatpush1.msra.mxu0 0.0
      %660 = vmatprep.subr.mxu0 0.0
      %661 = vmatpush1.msra.mxu0 0.0
      %662 = vmatprep.subr.mxu0 0.0
      %663 = vmatpush1.msra.mxu0 0.0
      %664 = vmatprep.subr.mxu0 0.0
      %665 = vmatpush1.msra.mxu0 0.0
      %666 = vmatprep.subr.mxu0 0.0
      %667 = vmatpush1.msra.mxu0 0.0
      %668 = vmatprep.subr.mxu0 0.0
      %669 = vmatpush1.msra.mxu0 0.0
      %670 = vmatprep.subr.mxu0 0.0
      %671 = vmatpush1.msra.mxu0 0.0
      %672 = vmatprep.subr.mxu0 0.0
      %673 = vmatpush1.msra.mxu0 0.0
      %674 = vmatprep.subr.mxu0 0.0
      %675 = vmatpush1.msra.mxu0 0.0
      %676 = vmatprep.subr.mxu0 0.0
      %677 = vmatpush1.msra.mxu0 0.0
      %678 = vmatprep.subr.mxu0 0.0
      %679 = vmatpush1.msra.mxu0 0.0
      %680 = vmatprep.mubr.f32.mxu0 0.0
      %681 = vmatmul.mubr.f32.gmra.mrb[0].mxu0 %v614
      %v682 = vpop.f32.mrb[0].mxu0
      %v683 = vadd.f32 0.0, %v682
      %v684 = vpop.f32.mrb[0].mxu0
      %685 = vdwg.mxu0
      %v686 = vadd.f32 %v609, %v683
      %s687 = scalar_lea.vmem %s3, 64
      %v688 = vld [vmem:[%s687] sm:$0xff]
      %v689 = vld [vmem:[%s687 + $0x8] sm:$0xff]
      %v691 = vrot.slane %v370, 1
      %v692 = vrot.slane %v371, 1
      %v693 = vsel %vm381, %v691, %v692
      %v694 = vsel %vm385, %v693, 0
      %696 = vmatprep.subr.mxu0 0.0
      %697 = vmatpush1.msra.mxu0 %v688
      %698 = vmatprep.subr.mxu0 0.0
      %699 = vmatpush1.msra.mxu0 %v689
      %700 = vmatprep.subr.mxu0 0.0
      %701 = vmatpush1.msra.mxu0 0.0
      %702 = vmatprep.subr.mxu0 0.0
      %703 = vmatpush1.msra.mxu0 0.0
      %704 = vmatprep.subr.mxu0 0.0
      %705 = vmatpush1.msra.mxu0 0.0
      %706 = vmatprep.subr.mxu0 0.0
      %707 = vmatpush1.msra.mxu0 0.0
      %708 = vmatprep.subr.mxu0 0.0
      %709 = vmatpush1.msra.mxu0 0.0
      %710 = vmatprep.subr.mxu0 0.0
      %711 = vmatpush1.msra.mxu0 0.0
      %712 = vmatprep.subr.mxu0 0.0
      %713 = vmatpush1.msra.mxu0 0.0
      %714 = vmatprep.subr.mxu0 0.0
      %715 = vmatpush1.msra.mxu0 0.0
      %716 = vmatprep.subr.mxu0 0.0
      %717 = vmatpush1.msra.mxu0 0.0
      %718 = vmatprep.subr.mxu0 0.0
      %719 = vmatpush1.msra.mxu0 0.0
      %720 = vmatprep.subr.mxu0 0.0
      %721 = vmatpush1.msra.mxu0 0.0
      %722 = vmatprep.subr.mxu0 0.0
      %723 = vmatpush1.msra.mxu0 0.0
      %724 = vmatprep.subr.mxu0 0.0
      %725 = vmatpush1.msra.mxu0 0.0
      %726 = vmatprep.subr.mxu0 0.0
      %727 = vmatpush1.msra.mxu0 0.0
      %728 = vmatprep.subr.mxu0 0.0
      %729 = vmatpush1.msra.mxu0 0.0
      %730 = vmatprep.subr.mxu0 0.0
      %731 = vmatpush1.msra.mxu0 0.0
      %732 = vmatprep.subr.mxu0 0.0
      %733 = vmatpush1.msra.mxu0 0.0
      %734 = vmatprep.subr.mxu0 0.0
      %735 = vmatpush1.msra.mxu0 0.0
      %736 = vmatprep.subr.mxu0 0.0
      %737 = vmatpush1.msra.mxu0 0.0
      %738 = vmatprep.subr.mxu0 0.0
      %739 = vmatpush1.msra.mxu0 0.0
      %740 = vmatprep.subr.mxu0 0.0
      %741 = vmatpush1.msra.mxu0 0.0
      %742 = vmatprep.subr.mxu0 0.0
      %743 = vmatpush1.msra.mxu0 0.0
      %744 = vmatprep.subr.mxu0 0.0
      %745 = vmatpush1.msra.mxu0 0.0
      %746 = vmatprep.subr.mxu0 0.0
      %747 = vmatpush1.msra.mxu0 0.0
      %748 = vmatprep.subr.mxu0 0.0
      %749 = vmatpush1.msra.mxu0 0.0
      %750 = vmatprep.subr.mxu0 0.0
      %751 = vmatpush1.msra.mxu0 0.0
      %752 = vmatprep.subr.mxu0 0.0
      %753 = vmatpush1.msra.mxu0 0.0
      %754 = vmatprep.subr.mxu0 0.0
      %755 = vmatpush1.msra.mxu0 0.0
      %756 = vmatprep.subr.mxu0 0.0
      %757 = vmatpush1.msra.mxu0 0.0
      %758 = vmatprep.subr.mxu0 0.0
      %759 = vmatpush1.msra.mxu0 0.0
      %760 = vmatprep.mubr.f32.mxu0 0.0
      %761 = vmatmul.mubr.f32.gmra.mrb[0].mxu0 %v694
      %v762 = vpop.f32.mrb[0].mxu0
      %v763 = vadd.f32 0.0, %v762
      %v764 = vpop.f32.mrb[0].mxu0
      %765 = vdwg.mxu0
      %v766 = vadd.f32 %v686, %v763
      %s767 = scalar_lea.vmem %s3, 80
      %v768 = vld [vmem:[%s767] sm:$0xff]
      %v769 = vld [vmem:[%s767 + $0x8] sm:$0xff]
      %v770 = vrot.slane %v370, 2
      %v771 = vrot.slane %v371, 2
      %v772 = vsel %vm533, %v770, %v771
      %v773 = vsel %vm385, %v772, 0
      %775 = vmatprep.subr.mxu0 0.0
      %776 = vmatpush1.msra.mxu0 %v768
      %777 = vmatprep.subr.mxu0 0.0
      %778 = vmatpush1.msra.mxu0 %v769
      %779 = vmatprep.subr.mxu0 0.0
      %780 = vmatpush1.msra.mxu0 0.0
      %781 = vmatprep.subr.mxu0 0.0
      %782 = vmatpush1.msra.mxu0 0.0
      %783 = vmatprep.subr.mxu0 0.0
      %784 = vmatpush1.msra.mxu0 0.0
      %785 = vmatprep.subr.mxu0 0.0
      %786 = vmatpush1.msra.mxu0 0.0
      %787 = vmatprep.subr.mxu0 0.0
      %788 = vmatpush1.msra.mxu0 0.0
      %789 = vmatprep.subr.mxu0 0.0
      %790 = vmatpush1.msra.mxu0 0.0
      %791 = vmatprep.subr.mxu0 0.0
      %792 = vmatpush1.msra.mxu0 0.0
      %793 = vmatprep.subr.mxu0 0.0
      %794 = vmatpush1.msra.mxu0 0.0
      %795 = vmatprep.subr.mxu0 0.0
      %796 = vmatpush1.msra.mxu0 0.0
      %797 = vmatprep.subr.mxu0 0.0
      %798 = vmatpush1.msra.mxu0 0.0
      %799 = vmatprep.subr.mxu0 0.0
      %800 = vmatpush1.msra.mxu0 0.0
      %801 = vmatprep.subr.mxu0 0.0
      %802 = vmatpush1.msra.mxu0 0.0
      %803 = vmatprep.subr.mxu0 0.0
      %804 = vmatpush1.msra.mxu0 0.0
      %805 = vmatprep.subr.mxu0 0.0
      %806 = vmatpush1.msra.mxu0 0.0
      %807 = vmatprep.subr.mxu0 0.0
      %808 = vmatpush1.msra.mxu0 0.0
      %809 = vmatprep.subr.mxu0 0.0
      %810 = vmatpush1.msra.mxu0 0.0
      %811 = vmatprep.subr.mxu0 0.0
      %812 = vmatpush1.msra.mxu0 0.0
      %813 = vmatprep.subr.mxu0 0.0
      %814 = vmatpush1.msra.mxu0 0.0
      %815 = vmatprep.subr.mxu0 0.0
      %816 = vmatpush1.msra.mxu0 0.0
      %817 = vmatprep.subr.mxu0 0.0
      %818 = vmatpush1.msra.mxu0 0.0
      %819 = vmatprep.subr.mxu0 0.0
      %820 = vmatpush1.msra.mxu0 0.0
      %821 = vmatprep.subr.mxu0 0.0
      %822 = vmatpush1.msra.mxu0 0.0
      %823 = vmatprep.subr.mxu0 0.0
      %824 = vmatpush1.msra.mxu0 0.0
      %825 = vmatprep.subr.mxu0 0.0
      %826 = vmatpush1.msra.mxu0 0.0
      %827 = vmatprep.subr.mxu0 0.0
      %828 = vmatpush1.msra.mxu0 0.0
      %829 = vmatprep.subr.mxu0 0.0
      %830 = vmatpush1.msra.mxu0 0.0
      %831 = vmatprep.subr.mxu0 0.0
      %832 = vmatpush1.msra.mxu0 0.0
      %833 = vmatprep.subr.mxu0 0.0
      %834 = vmatpush1.msra.mxu0 0.0
      %835 = vmatprep.subr.mxu0 0.0
      %836 = vmatpush1.msra.mxu0 0.0
      %837 = vmatprep.subr.mxu0 0.0
      %838 = vmatpush1.msra.mxu0 0.0
      %839 = vmatprep.mubr.f32.mxu0 0.0
      %840 = vmatmul.mubr.f32.gmra.mrb[0].mxu0 %v773
      %v841 = vpop.f32.mrb[0].mxu0
      %v842 = vadd.f32 0.0, %v841
      %v843 = vpop.f32.mrb[0].mxu0
      %844 = vdwg.mxu0
      %v845 = vadd.f32 %v766, %v842
      %s846 = scalar_lea.vmem %s3, 96
      %v847 = vld [vmem:[%s846] sm:$0xff]
      %v848 = vld [vmem:[%s846 + $0x8] sm:$0xff]
      %v850 = vsel %vm385, %v372, 0
      %852 = vmatprep.subr.mxu0 0.0
      %853 = vmatpush1.msra.mxu0 %v847
      %854 = vmatprep.subr.mxu0 0.0
      %855 = vmatpush1.msra.mxu0 %v848
      %856 = vmatprep.subr.mxu0 0.0
      %857 = vmatpush1.msra.mxu0 0.0
      %858 = vmatprep.subr.mxu0 0.0
      %859 = vmatpush1.msra.mxu0 0.0
      %860 = vmatprep.subr.mxu0 0.0
      %861 = vmatpush1.msra.mxu0 0.0
      %862 = vmatprep.subr.mxu0 0.0
      %863 = vmatpush1.msra.mxu0 0.0
      %864 = vmatprep.subr.mxu0 0.0
      %865 = vmatpush1.msra.mxu0 0.0
      %866 = vmatprep.subr.mxu0 0.0
      %867 = vmatpush1.msra.mxu0 0.0
      %868 = vmatprep.subr.mxu0 0.0
      %869 = vmatpush1.msra.mxu0 0.0
      %870 = vmatprep.subr.mxu0 0.0
      %871 = vmatpush1.msra.mxu0 0.0
      %872 = vmatprep.subr.mxu0 0.0
      %873 = vmatpush1.msra.mxu0 0.0
      %874 = vmatprep.subr.mxu0 0.0
      %875 = vmatpush1.msra.mxu0 0.0
      %876 = vmatprep.subr.mxu0 0.0
      %877 = vmatpush1.msra.mxu0 0.0
      %878 = vmatprep.subr.mxu0 0.0
      %879 = vmatpush1.msra.mxu0 0.0
      %880 = vmatprep.subr.mxu0 0.0
      %881 = vmatpush1.msra.mxu0 0.0
      %882 = vmatprep.subr.mxu0 0.0
      %883 = vmatpush1.msra.mxu0 0.0
      %884 = vmatprep.subr.mxu0 0.0
      %885 = vmatpush1.msra.mxu0 0.0
      %886 = vmatprep.subr.mxu0 0.0
      %887 = vmatpush1.msra.mxu0 0.0
      %888 = vmatprep.subr.mxu0 0.0
      %889 = vmatpush1.msra.mxu0 0.0
      %890 = vmatprep.subr.mxu0 0.0
      %891 = vmatpush1.msra.mxu0 0.0
      %892 = vmatprep.subr.mxu0 0.0
      %893 = vmatpush1.msra.mxu0 0.0
      %894 = vmatprep.subr.mxu0 0.0
      %895 = vmatpush1.msra.mxu0 0.0
      %896 = vmatprep.subr.mxu0 0.0
      %897 = vmatpush1.msra.mxu0 0.0
      %898 = vmatprep.subr.mxu0 0.0
      %899 = vmatpush1.msra.mxu0 0.0
      %900 = vmatprep.subr.mxu0 0.0
      %901 = vmatpush1.msra.mxu0 0.0
      %902 = vmatprep.subr.mxu0 0.0
      %903 = vmatpush1.msra.mxu0 0.0
      %904 = vmatprep.subr.mxu0 0.0
      %905 = vmatpush1.msra.mxu0 0.0
      %906 = vmatprep.subr.mxu0 0.0
      %907 = vmatpush1.msra.mxu0 0.0
      %908 = vmatprep.subr.mxu0 0.0
      %909 = vmatpush1.msra.mxu0 0.0
      %910 = vmatprep.subr.mxu0 0.0
      %911 = vmatpush1.msra.mxu0 0.0
      %912 = vmatprep.subr.mxu0 0.0
      %913 = vmatpush1.msra.mxu0 0.0
      %914 = vmatprep.subr.mxu0 0.0
      %915 = vmatpush1.msra.mxu0 0.0
      %916 = vmatprep.mubr.f32.mxu0 0.0
      %917 = vmatmul.mubr.f32.gmra.mrb[0].mxu0 %v850
      %v918 = vpop.f32.mrb[0].mxu0
      %v919 = vadd.f32 0.0, %v918
      %v920 = vpop.f32.mrb[0].mxu0
      %921 = vdwg.mxu0
      %v922 = vadd.f32 %v845, %v919
      %s923 = scalar_lea.vmem %s3, 112
      %v924 = vld [vmem:[%s923] sm:$0xff]
      %v925 = vld [vmem:[%s923 + $0x8] sm:$0xff]
      %v927 = vrot.slane %v372, 1
      %v928 = vrot.slane %v373, 1
      %v929 = vsel %vm381, %v927, %v928
      %v930 = vsel %vm385, %v929, 0
      %932 = vmatprep.subr.mxu0 0.0
      %933 = vmatpush1.msra.mxu0 %v924
      %934 = vmatprep.subr.mxu0 0.0
      %935 = vmatpush1.msra.mxu0 %v925
      %936 = vmatprep.subr.mxu0 0.0
      %937 = vmatpush1.msra.mxu0 0.0
      %938 = vmatprep.subr.mxu0 0.0
      %939 = vmatpush1.msra.mxu0 0.0
      %940 = vmatprep.subr.mxu0 0.0
      %941 = vmatpush1.msra.mxu0 0.0
      %942 = vmatprep.subr.mxu0 0.0
      %943 = vmatpush1.msra.mxu0 0.0
      %944 = vmatprep.subr.mxu0 0.0
      %945 = vmatpush1.msra.mxu0 0.0
      %946 = vmatprep.subr.mxu0 0.0
      %947 = vmatpush1.msra.mxu0 0.0
      %948 = vmatprep.subr.mxu0 0.0
      %949 = vmatpush1.msra.mxu0 0.0
      %950 = vmatprep.subr.mxu0 0.0
      %951 = vmatpush1.msra.mxu0 0.0
      %952 = vmatprep.subr.mxu0 0.0
      %953 = vmatpush1.msra.mxu0 0.0
      %954 = vmatprep.subr.mxu0 0.0
      %955 = vmatpush1.msra.mxu0 0.0
      %956 = vmatprep.subr.mxu0 0.0
      %957 = vmatpush1.msra.mxu0 0.0
      %958 = vmatprep.subr.mxu0 0.0
      %959 = vmatpush1.msra.mxu0 0.0
      %960 = vmatprep.subr.mxu0 0.0
      %961 = vmatpush1.msra.mxu0 0.0
      %962 = vmatprep.subr.mxu0 0.0
      %963 = vmatpush1.msra.mxu0 0.0
      %964 = vmatprep.subr.mxu0 0.0
      %965 = vmatpush1.msra.mxu0 0.0
      %966 = vmatprep.subr.mxu0 0.0
      %967 = vmatpush1.msra.mxu0 0.0
      %968 = vmatprep.subr.mxu0 0.0
      %969 = vmatpush1.msra.mxu0 0.0
      %970 = vmatprep.subr.mxu0 0.0
      %971 = vmatpush1.msra.mxu0 0.0
      %972 = vmatprep.subr.mxu0 0.0
      %973 = vmatpush1.msra.mxu0 0.0
      %974 = vmatprep.subr.mxu0 0.0
      %975 = vmatpush1.msra.mxu0 0.0
      %976 = vmatprep.subr.mxu0 0.0
      %977 = vmatpush1.msra.mxu0 0.0
      %978 = vmatprep.subr.mxu0 0.0
      %979 = vmatpush1.msra.mxu0 0.0
      %980 = vmatprep.subr.mxu0 0.0
      %981 = vmatpush1.msra.mxu0 0.0
      %982 = vmatprep.subr.mxu0 0.0
      %983 = vmatpush1.msra.mxu0 0.0
      %984 = vmatprep.subr.mxu0 0.0
      %985 = vmatpush1.msra.mxu0 0.0
      %986 = vmatprep.subr.mxu0 0.0
      %987 = vmatpush1.msra.mxu0 0.0
      %988 = vmatprep.subr.mxu0 0.0
      %989 = vmatpush1.msra.mxu0 0.0
      %990 = vmatprep.subr.mxu0 0.0
      %991 = vmatpush1.msra.mxu0 0.0
      %992 = vmatprep.subr.mxu0 0.0
      %993 = vmatpush1.msra.mxu0 0.0
      %994 = vmatprep.subr.mxu0 0.0
      %995 = vmatpush1.msra.mxu0 0.0
      %996 = vmatprep.mubr.f32.mxu0 0.0
      %997 = vmatmul.mubr.f32.gmra.mrb[0].mxu0 %v930
      %v998 = vpop.f32.mrb[0].mxu0
      %v999 = vadd.f32 0.0, %v998
      %v1000 = vpop.f32.mrb[0].mxu0
      %1001 = vdwg.mxu0
      %v1002 = vadd.f32 %v922, %v999
      %s1003 = scalar_lea.vmem %s3, 128
      %v1004 = vld [vmem:[%s1003] sm:$0xff]
      %v1005 = vld [vmem:[%s1003 + $0x8] sm:$0xff]
      %v1006 = vrot.slane %v372, 2
      %v1007 = vrot.slane %v373, 2
      %v1008 = vsel %vm533, %v1006, %v1007
      %v1009 = vsel %vm385, %v1008, 0
      %1011 = vmatprep.subr.mxu0 0.0
      %1012 = vmatpush1.msra.mxu0 %v1004
      %1013 = vmatprep.subr.mxu0 0.0
      %1014 = vmatpush1.msra.mxu0 %v1005
      %1015 = vmatprep.subr.mxu0 0.0
      %1016 = vmatpush1.msra.mxu0 0.0
      %1017 = vmatprep.subr.mxu0 0.0
      %1018 = vmatpush1.msra.mxu0 0.0
      %1019 = vmatprep.subr.mxu0 0.0
      %1020 = vmatpush1.msra.mxu0 0.0
      %1021 = vmatprep.subr.mxu0 0.0
      %1022 = vmatpush1.msra.mxu0 0.0
      %1023 = vmatprep.subr.mxu0 0.0
      %1024 = vmatpush1.msra.mxu0 0.0
      %1025 = vmatprep.subr.mxu0 0.0
      %1026 = vmatpush1.msra.mxu0 0.0
      %1027 = vmatprep.subr.mxu0 0.0
      %1028 = vmatpush1.msra.mxu0 0.0
      %1029 = vmatprep.subr.mxu0 0.0
      %1030 = vmatpush1.msra.mxu0 0.0
      %1031 = vmatprep.subr.mxu0 0.0
      %1032 = vmatpush1.msra.mxu0 0.0
      %1033 = vmatprep.subr.mxu0 0.0
      %1034 = vmatpush1.msra.mxu0 0.0
      %1035 = vmatprep.subr.mxu0 0.0
      %1036 = vmatpush1.msra.mxu0 0.0
      %1037 = vmatprep.subr.mxu0 0.0
      %1038 = vmatpush1.msra.mxu0 0.0
      %1039 = vmatprep.subr.mxu0 0.0
      %1040 = vmatpush1.msra.mxu0 0.0
      %1041 = vmatprep.subr.mxu0 0.0
      %1042 = vmatpush1.msra.mxu0 0.0
      %1043 = vmatprep.subr.mxu0 0.0
      %1044 = vmatpush1.msra.mxu0 0.0
      %1045 = vmatprep.subr.mxu0 0.0
      %1046 = vmatpush1.msra.mxu0 0.0
      %1047 = vmatprep.subr.mxu0 0.0
      %1048 = vmatpush1.msra.mxu0 0.0
      %1049 = vmatprep.subr.mxu0 0.0
      %1050 = vmatpush1.msra.mxu0 0.0
      %1051 = vmatprep.subr.mxu0 0.0
      %1052 = vmatpush1.msra.mxu0 0.0
      %1053 = vmatprep.subr.mxu0 0.0
      %1054 = vmatpush1.msra.mxu0 0.0
      %1055 = vmatprep.subr.mxu0 0.0
      %1056 = vmatpush1.msra.mxu0 0.0
      %1057 = vmatprep.subr.mxu0 0.0
      %1058 = vmatpush1.msra.mxu0 0.0
      %1059 = vmatprep.subr.mxu0 0.0
      %1060 = vmatpush1.msra.mxu0 0.0
      %1061 = vmatprep.subr.mxu0 0.0
      %1062 = vmatpush1.msra.mxu0 0.0
      %1063 = vmatprep.subr.mxu0 0.0
      %1064 = vmatpush1.msra.mxu0 0.0
      %1065 = vmatprep.subr.mxu0 0.0
      %1066 = vmatpush1.msra.mxu0 0.0
      %1067 = vmatprep.subr.mxu0 0.0
      %1068 = vmatpush1.msra.mxu0 0.0
      %1069 = vmatprep.subr.mxu0 0.0
      %1070 = vmatpush1.msra.mxu0 0.0
      %1071 = vmatprep.subr.mxu0 0.0
      %1072 = vmatpush1.msra.mxu0 0.0
      %1073 = vmatprep.subr.mxu0 0.0
      %1074 = vmatpush1.msra.mxu0 0.0
      %1075 = vmatprep.mubr.f32.mxu0 0.0
      %1076 = vmatmul.mubr.f32.gmra.mrb[0].mxu0 %v1009
      %v1077 = vpop.f32.mrb[0].mxu0
      %v1078 = vadd.f32 0.0, %v1077
      %v1079 = vpop.f32.mrb[0].mxu0
      %1080 = vdwg.mxu0
      %v1081 = vadd.f32 %v1002, %v1078
      %v1082 = vld [vmem:[%s4] sm:$0x1]
      %v1084 = vlaneseq
      %v1085 = vshrl.u32 %v1084, 7
      %v1086 = vsub.s32 0, %v1085
      %v1087 = vrot.slane %v1082, %v1086
      %v1089 = vmul.f32 %v1081, %v1087
      %v1090 = vld [vmem:[%s5] sm:$0x1]
      %v1092 = vlaneseq
      %v1093 = vshrl.u32 %v1092, 7
      %v1094 = vsub.s32 0, %v1093
      %v1095 = vrot.slane %v1090, %v1094
      %v1097 = vadd.f32 %v1089, %v1095
      %v1098 = vmax.f32 %v1097, 0.0
      %1099 = vst.msk [vmem:[%s367] sm:$0xff] %vm385, %v1098
      %p1100 = scmp.lt.s32.totalorder %s21, 1
      %s1101 = scalar_select %p1100, %s21, 1
      %p1102 = scmp.lt.s32.totalorder %s22, 7
      %s1103 = scalar_select %p1102, %s22, 7
      %s1104 = smul.addr %s1101, 8
      %s1105 = sadd.s32 %s1103, %s1104
      %s1106 = smul.addr %s1105, 8
      %s1107 = scalar_lea.vmem %s6, %s1106
      // Predicated region
      $region45: #{bottleneck_pallas.4} parent=43 // pred_check
        %p1108 = pneg %p200
      $region46: #{bottleneck_pallas.4} parent=43 // pred_check_branch
        %1110 = sbr.rel (%p1108) target = $region48
      $region47: #{bottleneck_pallas.4} parent=43 // pred_region
        _
      $region48: #{bottleneck_pallas.4} parent=43 // pred_fallthru
        _
    $region44: #{bottleneck_pallas.4} parent=5 // pred_fallthru
      _
    %p1111 = scmp.le.s32.totalorder 2, %s12
    // Predicated region
    $region49: #{bottleneck_pallas.4} parent=5 // pred_check
      %p1112 = pneg %p1111
    $region50: #{bottleneck_pallas.4} parent=5 // pred_check_branch
      %1114 = sbr.rel (%p1112) target = $region52
    $region51: #{bottleneck_pallas.4} parent=5 // pred_region
      %s1115 = ssub.s32 %s12, 2
      // Predicated region
      $region53: #{bottleneck_pallas.4} parent=51 // pred_check
        %p1116 = pneg %p206
      $region54: #{bottleneck_pallas.4} parent=51 // pred_check_branch
        %1118 = sbr.rel (%p1116) target = $region56
      $region55: #{bottleneck_pallas.4} parent=51 // pred_region
        %p1119 = scmp.lt.s32.totalorder %s23, 1
        %s1120 = scalar_select %p1119, %s23, 1
        %p1121 = scmp.lt.s32.totalorder %s24, 7
        %s1122 = scalar_select %p1121, %s24, 7
        %s1123 = smul.addr %s1120, 8
        %s1124 = sadd.s32 %s1122, %s1123
        %s1125 = smul.addr %s1124, 8
        %s1126 = scalar_lea.vmem %s6, %s1125
      $region56: #{bottleneck_pallas.4} parent=51 // pred_fallthru
        _
    $region52: #{bottleneck_pallas.4} parent=5 // pred_fallthru
      _
  $region6: #{bottleneck_pallas.4} parent=0 // loop_footer
    %s16 = sadd.s32 1, %s12
  $region7: #{bottleneck_pallas.4} parent=0 // loop_footer_branch
    %11 = sbr.rel target = $region3
  $region8: #{bottleneck_pallas.4} parent=0 // loop_exit
    _

</llo_original>
